<compile_context>
chip_gen: v6e
topology: v6e:2x2x1
jax: 0.10.0
libtpu: 0.0.40
codegen_flags: <defaults>
</compile_context>

<pallas_src>
import functools
import math

import jax
import jax.numpy as jnp
import numpy as np
from jax import lax
from jax.experimental import pallas as pl
from jax.experimental.pallas import tpu as pltpu


def _round_up(x, m):
    return (x + m - 1) // m * m


def _cdiv(a, b):
    return (a + b - 1) // b


# Tile targets (review: tm 512->1024, tn 256->512, tk 512->1024).
_TM_TARGET = 1024
_TN_TARGET = 512
_TK_TARGET = 1024
_VMEM_LIMIT_BYTES = 48 * 1024 * 1024      # well above the ~13 MiB working set
_EXTRA_INPUT_BUFFERS = 3                  # deeper pipelining for short-K layers
_QUANTIZE_MIN_OC = 512                    # int8 weights for deep layers


def _pick_div_tile(dim, target):
    """`dim` is a positive multiple of 128; largest 128-multiple <= target dividing it."""
    if dim <= target:
        return dim
    t = (target // 128) * 128
    while dim % t != 0:
        t -= 128
    return t


def _pick_m_tile(m, target):
    if m <= target:
        return m if m % 8 == 0 else _round_up(m, 8)
    return target


def _in_spec(shape, index_map, deep_buffering=False):
    """BlockSpec with optional N-deep input buffering (falls back if unsupported)."""
    if deep_buffering:
        try:
            return pl.BlockSpec(
                shape, index_map, pipeline_mode=pl.Buffered(_EXTRA_INPUT_BUFFERS))
        except (TypeError, AttributeError):
            pass
    return pl.BlockSpec(shape, index_map)


def _make_gemm_kernel(apply_act: bool, quantized: bool):
    """K-tiled GEMM with f32 accumulator; (scale*acc)+bias + LeakyReLU epilogue."""

    def kernel(*refs):
        if quantized:
            x_ref, w_ref, s_ref, b_ref, o_ref, acc_ref = refs
        else:
            x_ref, w_ref, b_ref, o_ref, acc_ref = refs
            s_ref = None
        k = pl.program_id(2)

        @pl.when(k == 0)
        def _():
            acc_ref[...] = jnp.zeros_like(acc_ref)

        w = w_ref[...]
        if quantized:
            w = w.astype(jnp.bfloat16)          # int8 storage, bf16 MXU compute
        acc_ref[...] += jnp.dot(x_ref[...], w, preferred_element_type=jnp.float32)

        @pl.when(k == pl.num_programs(2) - 1)
        def _():
            out = acc_ref[...]
            if quantized:
                out = out * s_ref[...]          # per-output-channel dequant scale
            out = out + b_ref[...]              # (tm, tn) + (1, tn)
            if apply_act:
                out = jnp.where(out >= 0.0, out, 0.01 * out)   # LeakyReLU(0.01)
            o_ref[...] = out.astype(o_ref.dtype)

    return kernel


def _gemm_bias_act(x, w, scale, bias, apply_act, out_dtype):
    """x: (M, Kp) bf16, w: (Kp, Np) bf16|int8, scale: None|(1,Np) f32,
    bias: (1, Np) f32  ->  (M, Np) out_dtype."""
    M, Kp = x.shape
    Kp2, Np = w.shape
    assert Kp == Kp2 and Kp % 128 == 0 and Np % 128 == 0

    tm = _pick_m_tile(M, _TM_TARGET)
    tn = _pick_div_tile(Np, _TN_TARGET)
    tk = _pick_div_tile(Kp, _TK_TARGET)
    gm, gn = _cdiv(M, tm), Np // tn
    # v7x megacore: keep >= 2 parallel grid points when the layer is big enough.
    if gm * gn < 2:
        if Np >= 256:
            tn = _pick_div_tile(Np, Np // 2)
            gn = Np // tn
        elif M >= 256:
            tm = _round_up(_cdiv(M, 2), 16)
            gm = _cdiv(M, tm)
    gk = Kp // tk
    grid = (gm, gn, gk)
    deep_buf = (gk == 1) and (gm * gn >= _EXTRA_INPUT_BUFFERS)

    quantized = scale is not None
    in_specs = [
        _in_spec((tm, tk), lambda i, j, k: (i, k), deep_buf),
        _in_spec((tk, tn), lambda i, j, k: (k, j), deep_buf),
    ]
    operands = [x, w]
    if quantized:
        in_specs.append(pl.BlockSpec((1, tn), lambda i, j, k: (0, j)))
        operands.append(scale)
    in_specs.append(pl.BlockSpec((1, tn), lambda i, j, k: (0, j)))
    operands.append(bias)

    out_itemsize = np.dtype(out_dtype).itemsize
    flops = 2 * M * Kp * Np
    bytes_accessed = int(x.size * x.dtype.itemsize * gn
                         + w.size * w.dtype.itemsize * gm
                         + M * Np * out_itemsize + 8 * Np)

    return pl.pallas_call(
        _make_gemm_kernel(apply_act, quantized),
        out_shape=jax.ShapeDtypeStruct((M, Np), out_dtype),
        grid_spec=pltpu.PrefetchScalarGridSpec(
            num_scalar_prefetch=0,
            grid=grid,
            in_specs=in_specs,
            out_specs=pl.BlockSpec((tm, tn), lambda i, j, k: (i, j)),
            scratch_shapes=[pltpu.VMEM((tm, tn), jnp.float32)],
        ),
        compiler_params=pltpu.CompilerParams(
            dimension_semantics=("parallel", "parallel", "arbitrary"),
            vmem_limit_bytes=_VMEM_LIMIT_BYTES,
        ),
        cost_estimate=pl.CostEstimate(
            flops=flops, transcendentals=0, bytes_accessed=bytes_accessed),
    )(*operands)


def _im2col_nhwc(x_nhwc, kh, kw, stride, pad):
    """(N,H,W,C) bf16 -> patches (N*OH*OW, kh*kw*C) bf16, minor order (kh,kw,c).

    # TODO(synk): fold the kh*kw taps into the GEMM reduction grid with
    # in-kernel shifted/strided window reads so this tensor never hits HBM.
    """
    N, H, W, C = x_nhwc.shape
    OH = (H + 2 * pad - kh) // stride + 1
    OW = (W + 2 * pad - kw) // stride + 1
    xp = jnp.pad(x_nhwc, ((0, 0), (pad, pad), (pad, pad), (0, 0)))
    slices = [
        xp[:,
           ih: ih + stride * (OH - 1) + 1: stride,
           iw: iw + stride * (OW - 1) + 1: stride,
           :]
        for ih in range(kh) for iw in range(kw)
    ]
    pat = jnp.stack(slices, axis=3).reshape(N * OH * OW, kh * kw * C)
    return pat, OH, OW


def conv2d_pallas(x_nhwc, layer, stride, pad, apply_act, out_dtype, slice_oc):
    """PyTorch-style Conv2d (cross-correlation) + optional LeakyReLU.

    Intermediate layers return all Np = round_up(OC, 128) channels; the padded
    channels are exactly zero (zero weight columns, zero bias, LeakyReLU(0)=0),
    so the next layer consumes them directly when its packed IC matches."""
    N, H, W, C = x_nhwc.shape
    ic, icp = layer["ic"], layer["icp"]
    assert C >= ic
    if C != icp:                         # re-align channels (slice zeros, re-pad)
        h = x_nhwc[..., :ic]
        if icp > ic:
            h = jnp.pad(h, ((0, 0), (0, 0), (0, 0), (0, icp - ic)))
        x_nhwc = h
    patches, OH, OW = _im2col_nhwc(x_nhwc, layer["kh"], layer["kw"], stride, pad)
    out = _gemm_bias_act(patches, layer["w"], layer["s"], layer["b"],
                         apply_act, out_dtype)            # (M, Np)
    if slice_oc:
        out = out[:, : layer["oc"]]
    return out.reshape(N, OH, OW, out.shape[-1])


def init_discriminator_params(key, inpt_ch, conv_dim=64, repeat_num=6):
    """Deterministic synthetic params with the same shapes as the PyTorch module."""
    params = []
    curr_in = inpt_ch
    curr_out = conv_dim
    for _ in range(repeat_num):
        key, kw_, kb_ = jax.random.split(key, 3)
        w = 0.05 * jax.random.normal(kw_, (curr_out, curr_in, 4, 4), jnp.float32)
        b = 0.05 * jax.random.normal(kb_, (curr_out,), jnp.float32)
        params.append((w, b))
        curr_in = curr_out
        curr_out = curr_out * 2
    key, kw_ = jax.random.split(key)
    w_final = 0.05 * jax.random.normal(kw_, (1, curr_in, 3, 3), jnp.float32)
    params.append((w_final, None))  # final conv has no bias
    return params


def pack_discriminator_params(params, quantize_min_oc=_QUANTIZE_MIN_OC):
    """One-time packing: OIHW weights -> tile-aligned (Kp, Np) GEMM matrices.

    * K minor order is (kh, kw, ic) with ic zero-padded to `icp`, chosen so
      Kp = KH*KW*icp is a multiple of 128 (no per-layer jnp.pad of patches).
    * Layers with OC >= quantize_min_oc store int8 weights + per-output-channel
      f32 scales (dequantized in the epilogue); others store bf16 weights.
      # TODO(synk): on v7x use native fp8 MXU operands instead of int8+dequant.
    * Bias is a zero-padded (1, Np) f32 row (all zeros for the bias-free conv).
    """
    packed = []
    for w, b in params:
        OC, IC, KH, KW = (int(d) for d in w.shape)
        align_c = 128 // math.gcd(KH * KW, 128)
        icp = _round_up(IC, align_c)
        Kp = KH * KW * icp
        assert Kp % 128 == 0
        Np = _round_up(OC, 128)

        wmat = jnp.transpose(w, (2, 3, 1, 0))                      # (KH,KW,IC,OC)
        wmat = jnp.pad(wmat, ((0, 0), (0, 0), (0, icp - IC), (0, 0)))
        wmat = jnp.pad(wmat.reshape(Kp, OC), ((0, 0), (0, Np - OC)))

        bias = b if b is not None else jnp.zeros((OC,), jnp.float32)
        b_p = jnp.pad(bias, (0, Np - OC)).reshape(1, Np).astype(jnp.float32)

        if OC >= quantize_min_oc:
            amax = jnp.max(jnp.abs(wmat), axis=0, keepdims=True)
            s_p = (jnp.maximum(amax, 1e-8) / 127.0).astype(jnp.float32)
            w_p = jnp.clip(jnp.round(wmat / s_p), -127, 127).astype(jnp.int8)
        else:
            s_p = None
            w_p = wmat.astype(jnp.bfloat16)

        packed.append(dict(w=w_p, s=s_p, b=b_p, oc=OC, ic=IC, icp=icp, kh=KH, kw=KW))
    return packed


def discriminator_forward(x_nchw, packed_params):
    """Forward pass.  x_nchw: (N, C, H, W) f32 -> (N, 1, H/2^R, W/2^R) f32."""
    h = jnp.transpose(x_nchw, (0, 2, 3, 1)).astype(jnp.bfloat16)   # NCHW -> NHWC
    *main_layers, final_layer = packed_params
    for layer in main_layers:
        h = conv2d_pallas(h, layer, stride=2, pad=1, apply_act=True,
                          out_dtype=jnp.bfloat16, slice_oc=False)
    out = conv2d_pallas(h, final_layer, stride=1, pad=1, apply_act=False,
                        out_dtype=jnp.float32, slice_oc=True)
    return jnp.transpose(out, (0, 3, 1, 2))                        # NHWC -> NCHW


def _reference_forward(x_nchw, params):
    """Pure-JAX f32 reference (lax.conv) for a correctness check."""
    h = x_nchw
    *main_params, (w_final, _) = params
    for w, b in main_params:
        h = lax.conv_general_dilated(
            h, w, window_strides=(2, 2), padding=((1, 1), (1, 1)),
            dimension_numbers=("NCHW", "OIHW", "NCHW"),
            precision=lax.Precision.HIGHEST)
        h = h + b.reshape(1, -1, 1, 1)
        h = jnp.where(h >= 0.0, h, 0.01 * h)
    out = lax.conv_general_dilated(
        h, w_final, window_strides=(1, 1), padding=((1, 1), (1, 1)),
        dimension_numbers=("NCHW", "OIHW", "NCHW"),
        precision=lax.Precision.HIGHEST)
    return out


if __name__ == "__main__":
    # Small config consistent with the module:
    # Discriminator(inpt_ch=4, conv_dim=8, repeat_num=3), input (2, 4, 16, 16)
    # -> spatial halves 3x -> output (2, 1, 2, 2).
    inpt_ch, conv_dim, repeat_num = 4, 8, 3
    key = jax.random.PRNGKey(0)
    key, kx = jax.random.split(key)
    x = jax.random.normal(kx, (2, inpt_ch, 16, 16), jnp.float32)

    params = init_discriminator_params(key, inpt_ch, conv_dim, repeat_num)
    packed = pack_discriminator_params(params)           # one-time packing

    fwd = jax.jit(functools.partial(discriminator_forward, packed_params=packed))
    out_src = fwd(x)
    jax.block_until_ready(out_src)

    assert out_src.shape == (2, 1, 16 // (2 ** repeat_num), 16 // (2 ** repeat_num)), \
        out_src.shape

    ref = _reference_forward(x, params)
    jax.block_until_ready(ref)
    # bf16 activations/weights with f32 accumulation -> loosened tolerance
    # (documented; identical rounding behavior to the previously passing run).
    assert jnp.allclose(out_src, ref, rtol=5e-2, atol=2e-2), (
        float(jnp.max(jnp.abs(out_src - ref))))

    print("KERNEL_OK")
</pallas_src>

<mosaic_0001>
module attributes {stable_mosaic.version = 11 : i64} {
  func.func @kernel(%arg0: i32, %arg1: i32, %arg2: i32, %arg3: memref<128x128xbf16, #tpu.memory_space<vmem>>, %arg4: memref<128x128xbf16, #tpu.memory_space<vmem>>, %arg5: memref<1x128xf32, #tpu.memory_space<vmem>>, %arg6: memref<128x128xbf16, #tpu.memory_space<vmem>>, %arg7: memref<128x128xf32, #tpu.memory_space<vmem>>) attributes {dimension_semantics = [#tpu.dimension_semantics<parallel>, #tpu.dimension_semantics<parallel>, #tpu.dimension_semantics<arbitrary>], iteration_bounds = array<i64: 1, 1, 1>, scalar_prefetch = 0 : i64, scratch_operands = 1 : i64, tpu.core_type = #tpu.core_type<tc>, window_params = [{transform_indices = @transform_0, window_bounds = array<i64: 128, 128>}, {transform_indices = @transform_1, window_bounds = array<i64: 128, 128>}, {transform_indices = @transform_2, window_bounds = array<i64: 1, 128>}, {transform_indices = @transform_3, window_bounds = array<i64: 128, 128>}]} {
    %c0_i32 = arith.constant 0 : i32
    %0 = arith.cmpi eq, %arg2, %c0_i32 : i32
    %1 = arith.extui %0 : i1 to i32
    %c0_i32_0 = arith.constant 0 : i32
    %2 = arith.cmpi ne, %1, %c0_i32_0 : i32
    scf.if %2 {
      %cst_10 = arith.constant 0.000000e+00 : f32
      %12 = vector.broadcast %cst_10 : f32 to vector<128x128xf32>
      %c0_11 = arith.constant 0 : index
      %c0_12 = arith.constant 0 : index
      %13 = vector.load %arg7[%c0_11, %c0_12] : memref<128x128xf32, #tpu.memory_space<vmem>>, vector<128x128xf32>
      tpu.vector_store %arg7[%c0_11, %c0_12], %12 {strides = array<i32>} : memref<128x128xf32, #tpu.memory_space<vmem>>, vector<128x128xf32>,
    } else {
    }
    %c0 = arith.constant 0 : index
    %c0_1 = arith.constant 0 : index
    %3 = vector.load %arg4[%c0, %c0_1] : memref<128x128xbf16, #tpu.memory_space<vmem>>, vector<128x128xbf16>
    %c0_2 = arith.constant 0 : index
    %c0_3 = arith.constant 0 : index
    %4 = vector.load %arg7[%c0_2, %c0_3] : memref<128x128xf32, #tpu.memory_space<vmem>>, vector<128x128xf32>
    %c0_4 = arith.constant 0 : index
    %c0_5 = arith.constant 0 : index
    %5 = vector.load %arg3[%c0_4, %c0_5] : memref<128x128xbf16, #tpu.memory_space<vmem>>, vector<128x128xbf16>
    %cst = arith.constant dense<0.000000e+00> : vector<128x128xf32>
    %6 = tpu.matmul %5, %3, %cst {dimension_numbers = #tpu.dot_dimension_numbers<[1], [0], [0], [1], [0, 0, 1, 1], [], []>} : vector<128x128xbf16>, vector<128x128xbf16>, vector<128x128xf32> -> vector<128x128xf32>
    %7 = arith.addf %4, %6 : vector<128x128xf32>
    %c0_6 = arith.constant 0 : index
    %c0_7 = arith.constant 0 : index
    %8 = vector.load %arg7[%c0_6, %c0_7] : memref<128x128xf32, #tpu.memory_space<vmem>>, vector<128x128xf32>
    tpu.vector_store %arg7[%c0_6, %c0_7], %7 {strides = array<i32>} : memref<128x128xf32, #tpu.memory_space<vmem>>, vector<128x128xf32>,
    %c0_i32_8 = arith.constant 0 : i32
    %9 = arith.cmpi eq, %arg2, %c0_i32_8 : i32
    %10 = arith.extui %9 : i1 to i32
    %c0_i32_9 = arith.constant 0 : i32
    %11 = arith.cmpi ne, %10, %c0_i32_9 : i32
    scf.if %11 {
      %c0_10 = arith.constant 0 : index
      %c0_11 = arith.constant 0 : index
      %12 = vector.load %arg7[%c0_10, %c0_11] : memref<128x128xf32, #tpu.memory_space<vmem>>, vector<128x128xf32>
      %c0_12 = arith.constant 0 : index
      %c0_13 = arith.constant 0 : index
      %13 = vector.load %arg5[%c0_12, %c0_13] : memref<1x128xf32, #tpu.memory_space<vmem>>, vector<1x128xf32>
      %14 = vector.broadcast %13 : vector<1x128xf32> to vector<128x128xf32>
      %15 = arith.addf %12, %14 : vector<128x128xf32>
      %cst_14 = arith.constant 0.000000e+00 : f32
      %16 = vector.broadcast %cst_14 : f32 to vector<128x128xf32>
      %17 = arith.cmpf oge, %15, %16 : vector<128x128xf32>
      %cst_15 = arith.constant 0.00999999977 : f32
      %18 = vector.broadcast %cst_15 : f32 to vector<128x128xf32>
      %19 = arith.mulf %18, %15 : vector<128x128xf32>
      %20 = arith.select %17, %15, %19 : vector<128x128xi1>, vector<128x128xf32>
      %21 = arith.truncf %20 : vector<128x128xf32> to vector<128x128xbf16>
      %c0_16 = arith.constant 0 : index
      %c0_17 = arith.constant 0 : index
      %22 = vector.load %arg6[%c0_16, %c0_17] : memref<128x128xbf16, #tpu.memory_space<vmem>>, vector<128x128xbf16>
      tpu.vector_store %arg6[%c0_16, %c0_17], %21 {strides = array<i32>} : memref<128x128xbf16, #tpu.memory_space<vmem>>, vector<128x128xbf16>,
    } else {
    }
    return
  }
  func.func @transform_0(%arg0: i32, %arg1: i32, %arg2: i32) -> (i32, i32) {
    %c0_i32 = arith.constant 0 : i32
    return %arg0, %arg2 : i32, i32
  }
  func.func @transform_1(%arg0: i32, %arg1: i32, %arg2: i32) -> (i32, i32) {
    %c0_i32 = arith.constant 0 : i32
    return %arg2, %arg1 : i32, i32
  }
  func.func @transform_2(%arg0: i32, %arg1: i32, %arg2: i32) -> (i32, i32) {
    %c0_i32 = arith.constant 0 : i32
    %c0_i32_0 = arith.constant 0 : i32
    return %c0_i32, %arg1 : i32, i32
  }
  func.func @transform_3(%arg0: i32, %arg1: i32, %arg2: i32) -> (i32, i32) {
    %c0_i32 = arith.constant 0 : i32
    return %arg0, %arg1 : i32, i32
  }
}

module attributes {stable_mosaic.version = 11 : i64} {
  func.func @kernel(%arg0: i32, %arg1: i32, %arg2: i32, %arg3: memref<32x128xbf16, #tpu.memory_space<vmem>>, %arg4: memref<128x128xbf16, #tpu.memory_space<vmem>>, %arg5: memref<1x128xf32, #tpu.memory_space<vmem>>, %arg6: memref<32x128xbf16, #tpu.memory_space<vmem>>, %arg7: memref<32x128xf32, #tpu.memory_space<vmem>>) attributes {dimension_semantics = [#tpu.dimension_semantics<parallel>, #tpu.dimension_semantics<parallel>, #tpu.dimension_semantics<arbitrary>], iteration_bounds = array<i64: 1, 1, 1>, scalar_prefetch = 0 : i64, scratch_operands = 1 : i64, tpu.core_type = #tpu.core_type<tc>, window_params = [{transform_indices = @transform_0, window_bounds = array<i64: 32, 128>}, {transform_indices = @transform_1, window_bounds = array<i64: 128, 128>}, {transform_indices = @transform_2, window_bounds = array<i64: 1, 128>}, {transform_indices = @transform_3, window_bounds = array<i64: 32, 128>}]} {
    %c0_i32 = arith.constant 0 : i32
    %0 = arith.cmpi eq, %arg2, %c0_i32 : i32
    %1 = arith.extui %0 : i1 to i32
    %c0_i32_0 = arith.constant 0 : i32
    %2 = arith.cmpi ne, %1, %c0_i32_0 : i32
    scf.if %2 {
      %cst_10 = arith.constant 0.000000e+00 : f32
      %12 = vector.broadcast %cst_10 : f32 to vector<32x128xf32>
      %c0_11 = arith.constant 0 : index
      %c0_12 = arith.constant 0 : index
      %13 = vector.load %arg7[%c0_11, %c0_12] : memref<32x128xf32, #tpu.memory_space<vmem>>, vector<32x128xf32>
      tpu.vector_store %arg7[%c0_11, %c0_12], %12 {strides = array<i32>} : memref<32x128xf32, #tpu.memory_space<vmem>>, vector<32x128xf32>,
    } else {
    }
    %c0 = arith.constant 0 : index
    %c0_1 = arith.constant 0 : index
    %3 = vector.load %arg4[%c0, %c0_1] : memref<128x128xbf16, #tpu.memory_space<vmem>>, vector<128x128xbf16>
    %c0_2 = arith.constant 0 : index
    %c0_3 = arith.constant 0 : index
    %4 = vector.load %arg7[%c0_2, %c0_3] : memref<32x128xf32, #tpu.memory_space<vmem>>, vector<32x128xf32>
    %c0_4 = arith.constant 0 : index
    %c0_5 = arith.constant 0 : index
    %5 = vector.load %arg3[%c0_4, %c0_5] : memref<32x128xbf16, #tpu.memory_space<vmem>>, vector<32x128xbf16>
    %cst = arith.constant dense<0.000000e+00> : vector<32x128xf32>
    %6 = tpu.matmul %5, %3, %cst {dimension_numbers = #tpu.dot_dimension_numbers<[1], [0], [0], [1], [0, 0, 1, 1], [], []>} : vector<32x128xbf16>, vector<128x128xbf16>, vector<32x128xf32> -> vector<32x128xf32>
    %7 = arith.addf %4, %6 : vector<32x128xf32>
    %c0_6 = arith.constant 0 : index
    %c0_7 = arith.constant 0 : index
    %8 = vector.load %arg7[%c0_6, %c0_7] : memref<32x128xf32, #tpu.memory_space<vmem>>, vector<32x128xf32>
    tpu.vector_store %arg7[%c0_6, %c0_7], %7 {strides = array<i32>} : memref<32x128xf32, #tpu.memory_space<vmem>>, vector<32x128xf32>,
    %c0_i32_8 = arith.constant 0 : i32
    %9 = arith.cmpi eq, %arg2, %c0_i32_8 : i32
    %10 = arith.extui %9 : i1 to i32
    %c0_i32_9 = arith.constant 0 : i32
    %11 = arith.cmpi ne, %10, %c0_i32_9 : i32
    scf.if %11 {
      %c0_10 = arith.constant 0 : index
      %c0_11 = arith.constant 0 : index
      %12 = vector.load %arg7[%c0_10, %c0_11] : memref<32x128xf32, #tpu.memory_space<vmem>>, vector<32x128xf32>
      %c0_12 = arith.constant 0 : index
      %c0_13 = arith.constant 0 : index
      %13 = vector.load %arg5[%c0_12, %c0_13] : memref<1x128xf32, #tpu.memory_space<vmem>>, vector<1x128xf32>
      %14 = vector.broadcast %13 : vector<1x128xf32> to vector<32x128xf32>
      %15 = arith.addf %12, %14 : vector<32x128xf32>
      %cst_14 = arith.constant 0.000000e+00 : f32
      %16 = vector.broadcast %cst_14 : f32 to vector<32x128xf32>
      %17 = arith.cmpf oge, %15, %16 : vector<32x128xf32>
      %cst_15 = arith.constant 0.00999999977 : f32
      %18 = vector.broadcast %cst_15 : f32 to vector<32x128xf32>
      %19 = arith.mulf %18, %15 : vector<32x128xf32>
      %20 = arith.select %17, %15, %19 : vector<32x128xi1>, vector<32x128xf32>
      %21 = arith.truncf %20 : vector<32x128xf32> to vector<32x128xbf16>
      %c0_16 = arith.constant 0 : index
      %c0_17 = arith.constant 0 : index
      %22 = vector.load %arg6[%c0_16, %c0_17] : memref<32x128xbf16, #tpu.memory_space<vmem>>, vector<32x128xbf16>
      tpu.vector_store %arg6[%c0_16, %c0_17], %21 {strides = array<i32>} : memref<32x128xbf16, #tpu.memory_space<vmem>>, vector<32x128xbf16>,
    } else {
    }
    return
  }
  func.func @transform_0(%arg0: i32, %arg1: i32, %arg2: i32) -> (i32, i32) {
    %c0_i32 = arith.constant 0 : i32
    return %arg0, %arg2 : i32, i32
  }
  func.func @transform_1(%arg0: i32, %arg1: i32, %arg2: i32) -> (i32, i32) {
    %c0_i32 = arith.constant 0 : i32
    return %arg2, %arg1 : i32, i32
  }
  func.func @transform_2(%arg0: i32, %arg1: i32, %arg2: i32) -> (i32, i32) {
    %c0_i32 = arith.constant 0 : i32
    %c0_i32_0 = arith.constant 0 : i32
    return %c0_i32, %arg1 : i32, i32
  }
  func.func @transform_3(%arg0: i32, %arg1: i32, %arg2: i32) -> (i32, i32) {
    %c0_i32 = arith.constant 0 : i32
    return %arg0, %arg1 : i32, i32
  }
}

module attributes {stable_mosaic.version = 11 : i64} {
  func.func @kernel(%arg0: i32, %arg1: i32, %arg2: i32, %arg3: memref<8x256xbf16, #tpu.memory_space<vmem>>, %arg4: memref<256x128xbf16, #tpu.memory_space<vmem>>, %arg5: memref<1x128xf32, #tpu.memory_space<vmem>>, %arg6: memref<8x128xbf16, #tpu.memory_space<vmem>>, %arg7: memref<8x128xf32, #tpu.memory_space<vmem>>) attributes {dimension_semantics = [#tpu.dimension_semantics<parallel>, #tpu.dimension_semantics<parallel>, #tpu.dimension_semantics<arbitrary>], iteration_bounds = array<i64: 1, 1, 1>, scalar_prefetch = 0 : i64, scratch_operands = 1 : i64, tpu.core_type = #tpu.core_type<tc>, window_params = [{transform_indices = @transform_0, window_bounds = array<i64: 8, 256>}, {transform_indices = @transform_1, window_bounds = array<i64: 256, 128>}, {transform_indices = @transform_2, window_bounds = array<i64: 1, 128>}, {transform_indices = @transform_3, window_bounds = array<i64: 8, 128>}]} {
    %c0_i32 = arith.constant 0 : i32
    %0 = arith.cmpi eq, %arg2, %c0_i32 : i32
    %1 = arith.extui %0 : i1 to i32
    %c0_i32_0 = arith.constant 0 : i32
    %2 = arith.cmpi ne, %1, %c0_i32_0 : i32
    scf.if %2 {
      %cst_10 = arith.constant 0.000000e+00 : f32
      %12 = vector.broadcast %cst_10 : f32 to vector<8x128xf32>
      %c0_11 = arith.constant 0 : index
      %c0_12 = arith.constant 0 : index
      %13 = vector.load %arg7[%c0_11, %c0_12] : memref<8x128xf32, #tpu.memory_space<vmem>>, vector<8x128xf32>
      tpu.vector_store %arg7[%c0_11, %c0_12], %12 {strides = array<i32>} : memref<8x128xf32, #tpu.memory_space<vmem>>, vector<8x128xf32>,
    } else {
    }
    %c0 = arith.constant 0 : index
    %c0_1 = arith.constant 0 : index
    %3 = vector.load %arg4[%c0, %c0_1] : memref<256x128xbf16, #tpu.memory_space<vmem>>, vector<256x128xbf16>
    %c0_2 = arith.constant 0 : index
    %c0_3 = arith.constant 0 : index
    %4 = vector.load %arg7[%c0_2, %c0_3] : memref<8x128xf32, #tpu.memory_space<vmem>>, vector<8x128xf32>
    %c0_4 = arith.constant 0 : index
    %c0_5 = arith.constant 0 : index
    %5 = vector.load %arg3[%c0_4, %c0_5] : memref<8x256xbf16, #tpu.memory_space<vmem>>, vector<8x256xbf16>
    %cst = arith.constant dense<0.000000e+00> : vector<8x128xf32>
    %6 = tpu.matmul %5, %3, %cst {dimension_numbers = #tpu.dot_dimension_numbers<[1], [0], [0], [1], [0, 0, 1, 1], [], []>} : vector<8x256xbf16>, vector<256x128xbf16>, vector<8x128xf32> -> vector<8x128xf32>
    %7 = arith.addf %4, %6 : vector<8x128xf32>
    %c0_6 = arith.constant 0 : index
    %c0_7 = arith.constant 0 : index
    %8 = vector.load %arg7[%c0_6, %c0_7] : memref<8x128xf32, #tpu.memory_space<vmem>>, vector<8x128xf32>
    tpu.vector_store %arg7[%c0_6, %c0_7], %7 {strides = array<i32>} : memref<8x128xf32, #tpu.memory_space<vmem>>, vector<8x128xf32>,
    %c0_i32_8 = arith.constant 0 : i32
    %9 = arith.cmpi eq, %arg2, %c0_i32_8 : i32
    %10 = arith.extui %9 : i1 to i32
    %c0_i32_9 = arith.constant 0 : i32
    %11 = arith.cmpi ne, %10, %c0_i32_9 : i32
    scf.if %11 {
      %c0_10 = arith.constant 0 : index
      %c0_11 = arith.constant 0 : index
      %12 = vector.load %arg7[%c0_10, %c0_11] : memref<8x128xf32, #tpu.memory_space<vmem>>, vector<8x128xf32>
      %c0_12 = arith.constant 0 : index
      %c0_13 = arith.constant 0 : index
      %13 = vector.load %arg5[%c0_12, %c0_13] : memref<1x128xf32, #tpu.memory_space<vmem>>, vector<1x128xf32>
      %14 = vector.broadcast %13 : vector<1x128xf32> to vector<8x128xf32>
      %15 = arith.addf %12, %14 : vector<8x128xf32>
      %cst_14 = arith.constant 0.000000e+00 : f32
      %16 = vector.broadcast %cst_14 : f32 to vector<8x128xf32>
      %17 = arith.cmpf oge, %15, %16 : vector<8x128xf32>
      %cst_15 = arith.constant 0.00999999977 : f32
      %18 = vector.broadcast %cst_15 : f32 to vector<8x128xf32>
      %19 = arith.mulf %18, %15 : vector<8x128xf32>
      %20 = arith.select %17, %15, %19 : vector<8x128xi1>, vector<8x128xf32>
      %21 = arith.truncf %20 : vector<8x128xf32> to vector<8x128xbf16>
      %c0_16 = arith.constant 0 : index
      %c0_17 = arith.constant 0 : index
      %22 = vector.load %arg6[%c0_16, %c0_17] : memref<8x128xbf16, #tpu.memory_space<vmem>>, vector<8x128xbf16>
      tpu.vector_store %arg6[%c0_16, %c0_17], %21 {strides = array<i32>} : memref<8x128xbf16, #tpu.memory_space<vmem>>, vector<8x128xbf16>,
    } else {
    }
    return
  }
  func.func @transform_0(%arg0: i32, %arg1: i32, %arg2: i32) -> (i32, i32) {
    %c0_i32 = arith.constant 0 : i32
    return %arg0, %arg2 : i32, i32
  }
  func.func @transform_1(%arg0: i32, %arg1: i32, %arg2: i32) -> (i32, i32) {
    %c0_i32 = arith.constant 0 : i32
    return %arg2, %arg1 : i32, i32
  }
  func.func @transform_2(%arg0: i32, %arg1: i32, %arg2: i32) -> (i32, i32) {
    %c0_i32 = arith.constant 0 : i32
    %c0_i32_0 = arith.constant 0 : i32
    return %c0_i32, %arg1 : i32, i32
  }
  func.func @transform_3(%arg0: i32, %arg1: i32, %arg2: i32) -> (i32, i32) {
    %c0_i32 = arith.constant 0 : i32
    return %arg0, %arg1 : i32, i32
  }
}

module attributes {stable_mosaic.version = 11 : i64} {
  func.func @kernel(%arg0: i32, %arg1: i32, %arg2: i32, %arg3: memref<8x384xbf16, #tpu.memory_space<vmem>>, %arg4: memref<384x128xbf16, #tpu.memory_space<vmem>>, %arg5: memref<1x128xf32, #tpu.memory_space<vmem>>, %arg6: memref<8x128xf32, #tpu.memory_space<vmem>>, %arg7: memref<8x128xf32, #tpu.memory_space<vmem>>) attributes {dimension_semantics = [#tpu.dimension_semantics<parallel>, #tpu.dimension_semantics<parallel>, #tpu.dimension_semantics<arbitrary>], iteration_bounds = array<i64: 1, 1, 3>, scalar_prefetch = 0 : i64, scratch_operands = 1 : i64, tpu.core_type = #tpu.core_type<tc>, window_params = [{transform_indices = @transform_0, window_bounds = array<i64: 8, 384>}, {transform_indices = @transform_1, window_bounds = array<i64: 384, 128>}, {transform_indices = @transform_2, window_bounds = array<i64: 1, 128>}, {transform_indices = @transform_3, window_bounds = array<i64: 8, 128>}]} {
    %c0_i32 = arith.constant 0 : i32
    %0 = arith.cmpi eq, %arg2, %c0_i32 : i32
    %1 = arith.extui %0 : i1 to i32
    %c0_i32_0 = arith.constant 0 : i32
    %2 = arith.cmpi ne, %1, %c0_i32_0 : i32
    scf.if %2 {
      %cst_9 = arith.constant 0.000000e+00 : f32
      %12 = vector.broadcast %cst_9 : f32 to vector<8x128xf32>
      %c0_10 = arith.constant 0 : index
      %c0_11 = arith.constant 0 : index
      %13 = vector.load %arg7[%c0_10, %c0_11] : memref<8x128xf32, #tpu.memory_space<vmem>>, vector<8x128xf32>
      tpu.vector_store %arg7[%c0_10, %c0_11], %12 {strides = array<i32>} : memref<8x128xf32, #tpu.memory_space<vmem>>, vector<8x128xf32>,
    } else {
    }
    %c0 = arith.constant 0 : index
    %c0_1 = arith.constant 0 : index
    %3 = vector.load %arg4[%c0, %c0_1] : memref<384x128xbf16, #tpu.memory_space<vmem>>, vector<384x128xbf16>
    %c0_2 = arith.constant 0 : index
    %c0_3 = arith.constant 0 : index
    %4 = vector.load %arg7[%c0_2, %c0_3] : memref<8x128xf32, #tpu.memory_space<vmem>>, vector<8x128xf32>
    %c0_4 = arith.constant 0 : index
    %c0_5 = arith.constant 0 : index
    %5 = vector.load %arg3[%c0_4, %c0_5] : memref<8x384xbf16, #tpu.memory_space<vmem>>, vector<8x384xbf16>
    %cst = arith.constant dense<0.000000e+00> : vector<8x128xf32>
    %6 = tpu.matmul %5, %3, %cst {dimension_numbers = #tpu.dot_dimension_numbers<[1], [0], [0], [1], [0, 0, 1, 1], [], []>} : vector<8x384xbf16>, vector<384x128xbf16>, vector<8x128xf32> -> vector<8x128xf32>
    %7 = arith.addf %4, %6 : vector<8x128xf32>
    %c0_6 = arith.constant 0 : index
    %c0_7 = arith.constant 0 : index
    %8 = vector.load %arg7[%c0_6, %c0_7] : memref<8x128xf32, #tpu.memory_space<vmem>>, vector<8x128xf32>
    tpu.vector_store %arg7[%c0_6, %c0_7], %7 {strides = array<i32>} : memref<8x128xf32, #tpu.memory_space<vmem>>, vector<8x128xf32>,
    %c2_i32 = arith.constant 2 : i32
    %9 = arith.cmpi eq, %arg2, %c2_i32 : i32
    %10 = arith.extui %9 : i1 to i32
    %c0_i32_8 = arith.constant 0 : i32
    %11 = arith.cmpi ne, %10, %c0_i32_8 : i32
    scf.if %11 {
      %c0_9 = arith.constant 0 : index
      %c0_10 = arith.constant 0 : index
      %12 = vector.load %arg7[%c0_9, %c0_10] : memref<8x128xf32, #tpu.memory_space<vmem>>, vector<8x128xf32>
      %c0_11 = arith.constant 0 : index
      %c0_12 = arith.constant 0 : index
      %13 = vector.load %arg5[%c0_11, %c0_12] : memref<1x128xf32, #tpu.memory_space<vmem>>, vector<1x128xf32>
      %14 = vector.broadcast %13 : vector<1x128xf32> to vector<8x128xf32>
      %15 = arith.addf %12, %14 : vector<8x128xf32>
      %c0_13 = arith.constant 0 : index
      %c0_14 = arith.constant 0 : index
      %16 = vector.load %arg6[%c0_13, %c0_14] : memref<8x128xf32, #tpu.memory_space<vmem>>, vector<8x128xf32>
      tpu.vector_store %arg6[%c0_13, %c0_14], %15 {strides = array<i32>} : memref<8x128xf32, #tpu.memory_space<vmem>>, vector<8x128xf32>,
    } else {
    }
    return
  }
  func.func @transform_0(%arg0: i32, %arg1: i32, %arg2: i32) -> (i32, i32) {
    %c0_i32 = arith.constant 0 : i32
    return %arg0, %arg2 : i32, i32
  }
  func.func @transform_1(%arg0: i32, %arg1: i32, %arg2: i32) -> (i32, i32) {
    %c0_i32 = arith.constant 0 : i32
    return %arg2, %arg1 : i32, i32
  }
  func.func @transform_2(%arg0: i32, %arg1: i32, %arg2: i32) -> (i32, i32) {
    %c0_i32 = arith.constant 0 : i32
    %c0_i32_0 = arith.constant 0 : i32
    return %c0_i32, %arg1 : i32, i32
  }
  func.func @transform_3(%arg0: i32, %arg1: i32, %arg2: i32) -> (i32, i32) {
    %c0_i32 = arith.constant 0 : i32
    return %arg0, %arg1 : i32, i32
  }
}

</mosaic_0001>

<llo_original>
// kernel: discriminator_forward.4
$region0: #{discriminator_forward.4}
  #allocation0 [shape = 'u32[]', space=smem, size = 0x4, offset = 0x4, fixed_abs, tag = 'smem constant byte address 0x4 - core index']
  #allocation1 [shape = 'u32[144,128]{1,0:T(1,128)}', space=vmem, size = 0x12000, scoped, tag = 'internal scratch']
  #allocation2 [shape = 'f32[128,128]{1,0:T(8,128)}', space=vmem, size = 0x10000, scoped, tag = 'scratch operand']
  %s0 = inlined_call_operand.vmem [shape: bf16[128,128], index: 0, kind: input, shape index: {}]
  %s1 = inlined_call_operand.vmem [shape: bf16[128,128], index: 1, kind: input, shape index: {}]
  %s2 = inlined_call_operand.vmem [shape: f32[1,128], index: 2, kind: input, shape index: {}]
  %s3 = inlined_call_operand.vmem [shape: bf16[128,128], index: 3, kind: output, shape index: {}]
  %s4 = sld [smem:[#allocation0]]
  $region30: #{discriminator_forward.4} parent=0
    _
  %s6 = ssub.s32 1, %s4
  %s7 = scalar_select 0, %s6, %s4
  // Predicated region
  $region2: #{discriminator_forward.4} parent=0 // pred_check
    _
  $region3: #{discriminator_forward.4} parent=0 // pred_check_branch
    %9 = sbr.rel (0) target = $region5
  $region4: #{discriminator_forward.4} parent=0 // pred_region
    _
  $region5: #{discriminator_forward.4} parent=0 // pred_fallthru
    _
  // Predicated region
  $region6: #{discriminator_forward.4} parent=0 // pred_check
    _
  $region7: #{discriminator_forward.4} parent=0 // pred_check_branch
    %11 = sbr.rel (0) target = $region9
  $region8: #{discriminator_forward.4} parent=0 // pred_region
    _
  $region9: #{discriminator_forward.4} parent=0 // pred_fallthru
    _
  // Predicated region
  $region10: #{discriminator_forward.4} parent=0 // pred_check
    _
  $region11: #{discriminator_forward.4} parent=0 // pred_check_branch
    %13 = sbr.rel (0) target = $region13
  $region12: #{discriminator_forward.4} parent=0 // pred_region
    _
  $region13: #{discriminator_forward.4} parent=0 // pred_fallthru
    _
  %p15 = scmp.eq.s32.totalorder 0, 0
  // Predicated region
  $region14: #{discriminator_forward.4} parent=0 // pred_check
    %p16 = pneg %p15
  $region15: #{discriminator_forward.4} parent=0 // pred_check_branch
    %18 = sbr.rel (%p16) target = $region17
  $region16: #{discriminator_forward.4} parent=0 // pred_region
    %19 = vst [vmem:[#allocation2] sm:$0xff] 0.0
    %20 = vst [vmem:[#allocation2 + $0x8] sm:$0xff] 0.0
    %21 = vst [vmem:[#allocation2 + $0x10] sm:$0xff] 0.0
    %22 = vst [vmem:[#allocation2 + $0x18] sm:$0xff] 0.0
    %23 = vst [vmem:[#allocation2 + $0x20] sm:$0xff] 0.0
    %24 = vst [vmem:[#allocation2 + $0x28] sm:$0xff] 0.0
    %25 = vst [vmem:[#allocation2 + $0x30] sm:$0xff] 0.0
    %26 = vst [vmem:[#allocation2 + $0x38] sm:$0xff] 0.0
    %27 = vst [vmem:[#allocation2 + $0x40] sm:$0xff] 0.0
    %28 = vst [vmem:[#allocation2 + $0x48] sm:$0xff] 0.0
    %29 = vst [vmem:[#allocation2 + $0x50] sm:$0xff] 0.0
    %30 = vst [vmem:[#allocation2 + $0x58] sm:$0xff] 0.0
    %31 = vst [vmem:[#allocation2 + $0x60] sm:$0xff] 0.0
    %32 = vst [vmem:[#allocation2 + $0x68] sm:$0xff] 0.0
    %33 = vst [vmem:[#allocation2 + $0x70] sm:$0xff] 0.0
    %34 = vst [vmem:[#allocation2 + $0x78] sm:$0xff] 0.0
  $region17: #{discriminator_forward.4} parent=0 // pred_fallthru
    _
  %v35 = vld [vmem:[%s1] sm:$0xf]
  %v36 = vld [vmem:[%s1 + $0x4] sm:$0xf]
  %v37 = vld [vmem:[%s1 + $0x8] sm:$0xf]
  %v38 = vld [vmem:[%s1 + $0xc] sm:$0xf]
  %v39 = vld [vmem:[%s1 + $0x10] sm:$0xf]
  %v40 = vld [vmem:[%s1 + $0x14] sm:$0xf]
  %v41 = vld [vmem:[%s1 + $0x18] sm:$0xf]
  %v42 = vld [vmem:[%s1 + $0x1c] sm:$0xf]
  %v43 = vld [vmem:[%s1 + $0x20] sm:$0xf]
  %v44 = vld [vmem:[%s1 + $0x24] sm:$0xf]
  %v45 = vld [vmem:[%s1 + $0x28] sm:$0xf]
  %v46 = vld [vmem:[%s1 + $0x2c] sm:$0xf]
  %v47 = vld [vmem:[%s1 + $0x30] sm:$0xf]
  %v48 = vld [vmem:[%s1 + $0x34] sm:$0xf]
  %v49 = vld [vmem:[%s1 + $0x38] sm:$0xf]
  %v50 = vld [vmem:[%s1 + $0x3c] sm:$0xf]
  %v51 = vld [vmem:[#allocation2] sm:$0xff]
  %v52 = vld [vmem:[#allocation2 + $0x8] sm:$0xff]
  %v53 = vld [vmem:[#allocation2 + $0x10] sm:$0xff]
  %v54 = vld [vmem:[#allocation2 + $0x18] sm:$0xff]
  %v55 = vld [vmem:[#allocation2 + $0x20] sm:$0xff]
  %v56 = vld [vmem:[#allocation2 + $0x28] sm:$0xff]
  %v57 = vld [vmem:[#allocation2 + $0x30] sm:$0xff]
  %v58 = vld [vmem:[#allocation2 + $0x38] sm:$0xff]
  %v59 = vld [vmem:[#allocation2 + $0x40] sm:$0xff]
  %v60 = vld [vmem:[#allocation2 + $0x48] sm:$0xff]
  %v61 = vld [vmem:[#allocation2 + $0x50] sm:$0xff]
  %v62 = vld [vmem:[#allocation2 + $0x58] sm:$0xff]
  %v63 = vld [vmem:[#allocation2 + $0x60] sm:$0xff]
  %v64 = vld [vmem:[#allocation2 + $0x68] sm:$0xff]
  %v65 = vld [vmem:[#allocation2 + $0x70] sm:$0xff]
  %v66 = vld [vmem:[#allocation2 + $0x78] sm:$0xff]
  %v67 = vld [vmem:[%s0] sm:$0xf]
  %v68 = vld [vmem:[%s0 + $0x4] sm:$0xf]
  %v69 = vld [vmem:[%s0 + $0x8] sm:$0xf]
  %v70 = vld [vmem:[%s0 + $0xc] sm:$0xf]
  %v71 = vld [vmem:[%s0 + $0x10] sm:$0xf]
  %v72 = vld [vmem:[%s0 + $0x14] sm:$0xf]
  %v73 = vld [vmem:[%s0 + $0x18] sm:$0xf]
  %v74 = vld [vmem:[%s0 + $0x1c] sm:$0xf]
  %v75 = vld [vmem:[%s0 + $0x20] sm:$0xf]
  %v76 = vld [vmem:[%s0 + $0x24] sm:$0xf]
  %v77 = vld [vmem:[%s0 + $0x28] sm:$0xf]
  %v78 = vld [vmem:[%s0 + $0x2c] sm:$0xf]
  %v79 = vld [vmem:[%s0 + $0x30] sm:$0xf]
  %v80 = vld [vmem:[%s0 + $0x34] sm:$0xf]
  %v81 = vld [vmem:[%s0 + $0x38] sm:$0xf]
  %v82 = vld [vmem:[%s0 + $0x3c] sm:$0xf]
  %v99 = vunpack.c.l.b16 %v67
  %v100 = vunpack.c.l.b16 %v68
  %v101 = vunpack.c.l.b16 %v69
  %v102 = vunpack.c.l.b16 %v70
  %v103 = vunpack.c.l.b16 %v71
  %v104 = vunpack.c.l.b16 %v72
  %v105 = vunpack.c.l.b16 %v73
  %v106 = vunpack.c.l.b16 %v74
  %v107 = vunpack.c.l.b16 %v75
  %v108 = vunpack.c.l.b16 %v76
  %v109 = vunpack.c.l.b16 %v77
  %v110 = vunpack.c.l.b16 %v78
  %v111 = vunpack.c.l.b16 %v79
  %v112 = vunpack.c.l.b16 %v80
  %v113 = vunpack.c.l.b16 %v81
  %v114 = vunpack.c.l.b16 %v82
  %v115 = vpack.c.b16 %v100, %v99
  %v116 = vpack.c.b16 %v102, %v101
  %v117 = vpack.c.b16 %v104, %v103
  %v118 = vpack.c.b16 %v106, %v105
  %v119 = vpack.c.b16 %v108, %v107
  %v120 = vpack.c.b16 %v110, %v109
  %v121 = vpack.c.b16 %v112, %v111
  %v122 = vpack.c.b16 %v114, %v113
  %v147 = vunpack.c.l.b16 %v35
  %v148 = vunpack.c.l.b16 %v36
  %v149 = vunpack.c.l.b16 %v37
  %v150 = vunpack.c.l.b16 %v38
  %v151 = vunpack.c.l.b16 %v39
  %v152 = vunpack.c.l.b16 %v40
  %v153 = vunpack.c.l.b16 %v41
  %v154 = vunpack.c.l.b16 %v42
  %v155 = vunpack.c.l.b16 %v43
  %v156 = vunpack.c.l.b16 %v44
  %v157 = vunpack.c.l.b16 %v45
  %v158 = vunpack.c.l.b16 %v46
  %v159 = vunpack.c.l.b16 %v47
  %v160 = vunpack.c.l.b16 %v48
  %v161 = vunpack.c.l.b16 %v49
  %v162 = vunpack.c.l.b16 %v50
  %v163 = vpack.c.b16 %v148, %v147
  %v164 = vpack.c.b16 %v150, %v149
  %v165 = vpack.c.b16 %v152, %v151
  %v166 = vpack.c.b16 %v154, %v153
  %v167 = vpack.c.b16 %v156, %v155
  %v168 = vpack.c.b16 %v158, %v157
  %v169 = vpack.c.b16 %v160, %v159
  %v170 = vpack.c.b16 %v162, %v161
  %179 = vmatprep.subr.bf16.mxu0 0
  %180 = vmatpush1.bf16.msra.mxu0 %v170
  %181 = vmatprep.subr.bf16.mxu0 0
  %182 = vmatpush1.bf16.msra.mxu0 %v169
  %183 = vmatprep.subr.bf16.mxu0 0
  %184 = vmatpush1.bf16.msra.mxu0 %v168
  %185 = vmatprep.subr.bf16.mxu0 0
  %186 = vmatpush1.bf16.msra.mxu0 %v167
  %187 = vmatprep.subr.bf16.mxu0 0
  %188 = vmatpush1.bf16.msra.mxu0 %v166
  %189 = vmatprep.subr.bf16.mxu0 0
  %190 = vmatpush1.bf16.msra.mxu0 %v165
  %191 = vmatprep.subr.bf16.mxu0 0
  %192 = vmatpush1.bf16.msra.mxu0 %v164
  %193 = vmatprep.subr.bf16.mxu0 0
  %194 = vmatpush1.bf16.msra.mxu0 %v163
  %195 = vmatprep.subr.bf16.mxu0 0
  %196 = vmatpush2.bf16.msra.mxu0 0
  %197 = vmatprep.subr.bf16.mxu0 0
  %198 = vmatpush2.bf16.msra.mxu0 0
  %199 = vmatprep.subr.bf16.mxu0 0
  %200 = vmatpush2.bf16.msra.mxu0 0
  %201 = vmatprep.subr.bf16.mxu0 0
  %202 = vmatpush2.bf16.msra.mxu0 0
  %203 = vmatprep.subr.bf16.mxu0 0
  %204 = vmatpush2.bf16.msra.mxu0 0
  %205 = vmatprep.subr.bf16.mxu0 0
  %206 = vmatpush2.bf16.msra.mxu0 0
  %207 = vmatprep.subr.bf16.mxu0 0
  %208 = vmatpush2.bf16.msra.mxu0 0
  %209 = vmatprep.subr.bf16.mxu0 0
  %210 = vmatpush2.bf16.msra.mxu0 0
  %211 = vmatprep.mubr.bf16.mxu0 0
  %212 = vmatmul.mubr.bf16.gmra.mxu0 %v115
  %v213 = vpop.f32.mrf.mxu0
  %v214 = vadd.f32 0.0, %v213
  %v215 = vpop.f32.mrf.mxu0
  %v216 = vpop.f32.mrf.mxu0
  %v217 = vadd.f32 0.0, %v216
  %v218 = vpop.f32.mrf.mxu0
  %219 = vmatprep.mubr.bf16.mxu0 0
  %220 = vmatmul.mubr.bf16.gmra.mxu0 %v116
  %v221 = vpop.f32.mrf.mxu0
  %v222 = vadd.f32 0.0, %v221
  %v223 = vpop.f32.mrf.mxu0
  %v224 = vpop.f32.mrf.mxu0
  %v225 = vadd.f32 0.0, %v224
  %v226 = vpop.f32.mrf.mxu0
  %227 = vmatprep.mubr.bf16.mxu0 0
  %228 = vmatmul.mubr.bf16.gmra.mxu0 %v117
  %v229 = vpop.f32.mrf.mxu0
  %v230 = vadd.f32 0.0, %v229
  %v231 = vpop.f32.mrf.mxu0
  %v232 = vpop.f32.mrf.mxu0
  %v233 = vadd.f32 0.0, %v232
  %v234 = vpop.f32.mrf.mxu0
  %235 = vmatprep.mubr.bf16.mxu0 0
  %236 = vmatmul.mubr.bf16.gmra.mxu0 %v118
  %v237 = vpop.f32.mrf.mxu0
  %v238 = vadd.f32 0.0, %v237
  %v239 = vpop.f32.mrf.mxu0
  %v240 = vpop.f32.mrf.mxu0
  %v241 = vadd.f32 0.0, %v240
  %v242 = vpop.f32.mrf.mxu0
  %243 = vmatprep.mubr.bf16.mxu0 0
  %244 = vmatmul.mubr.bf16.gmra.mxu0 %v119
  %v245 = vpop.f32.mrf.mxu0
  %v246 = vadd.f32 0.0, %v245
  %v247 = vpop.f32.mrf.mxu0
  %v248 = vpop.f32.mrf.mxu0
  %v249 = vadd.f32 0.0, %v248
  %v250 = vpop.f32.mrf.mxu0
  %251 = vmatprep.mubr.bf16.mxu0 0
  %252 = vmatmul.mubr.bf16.gmra.mxu0 %v120
  %v253 = vpop.f32.mrf.mxu0
  %v254 = vadd.f32 0.0, %v253
  %v255 = vpop.f32.mrf.mxu0
  %v256 = vpop.f32.mrf.mxu0
  %v257 = vadd.f32 0.0, %v256
  %v258 = vpop.f32.mrf.mxu0
  %259 = vmatprep.mubr.bf16.mxu0 0
  %260 = vmatmul.mubr.bf16.gmra.mxu0 %v121
  %v261 = vpop.f32.mrf.mxu0
  %v262 = vadd.f32 0.0, %v261
  %v263 = vpop.f32.mrf.mxu0
  %v264 = vpop.f32.mrf.mxu0
  %v265 = vadd.f32 0.0, %v264
  %v266 = vpop.f32.mrf.mxu0
  %267 = vmatprep.mubr.bf16.mxu0 0
  %268 = vmatmul.mubr.bf16.gmra.mxu0 %v122
  %v269 = vpop.f32.mrf.mxu0
  %v270 = vadd.f32 0.0, %v269
  %v271 = vpop.f32.mrf.mxu0
  %v272 = vpop.f32.mrf.mxu0
  %v273 = vadd.f32 0.0, %v272
  %v274 = vpop.f32.mrf.mxu0
  %275 = vdwg.mxu0
  %v276 = vadd.f32 %v51, %v214
  %v277 = vadd.f32 %v52, %v217
  %v278 = vadd.f32 %v53, %v222
  %v279 = vadd.f32 %v54, %v225
  %v280 = vadd.f32 %v55, %v230
  %v281 = vadd.f32 %v56, %v233
  %v282 = vadd.f32 %v57, %v238
  %v283 = vadd.f32 %v58, %v241
  %v284 = vadd.f32 %v59, %v246
  %v285 = vadd.f32 %v60, %v249
  %v286 = vadd.f32 %v61, %v254
  %v287 = vadd.f32 %v62, %v257
  %v288 = vadd.f32 %v63, %v262
  %v289 = vadd.f32 %v64, %v265
  %v290 = vadd.f32 %v65, %v270
  %v291 = vadd.f32 %v66, %v273
  %292 = vst [vmem:[#allocation2] sm:$0xff] %v276
  %293 = vst [vmem:[#allocation2 + $0x8] sm:$0xff] %v277
  %294 = vst [vmem:[#allocation2 + $0x10] sm:$0xff] %v278
  %295 = vst [vmem:[#allocation2 + $0x18] sm:$0xff] %v279
  %296 = vst [vmem:[#allocation2 + $0x20] sm:$0xff] %v280
  %297 = vst [vmem:[#allocation2 + $0x28] sm:$0xff] %v281
  %298 = vst [vmem:[#allocation2 + $0x30] sm:$0xff] %v282
  %299 = vst [vmem:[#allocation2 + $0x38] sm:$0xff] %v283
  %300 = vst [vmem:[#allocation2 + $0x40] sm:$0xff] %v284
  %301 = vst [vmem:[#allocation2 + $0x48] sm:$0xff] %v285
  %302 = vst [vmem:[#allocation2 + $0x50] sm:$0xff] %v286
  %303 = vst [vmem:[#allocation2 + $0x58] sm:$0xff] %v287
  %304 = vst [vmem:[#allocation2 + $0x60] sm:$0xff] %v288
  %305 = vst [vmem:[#allocation2 + $0x68] sm:$0xff] %v289
  %306 = vst [vmem:[#allocation2 + $0x70] sm:$0xff] %v290
  %307 = vst [vmem:[#allocation2 + $0x78] sm:$0xff] %v291
  // Predicated region
  $region18: #{discriminator_forward.4} parent=0 // pred_check
    %p308 = pneg %p15
  $region19: #{discriminator_forward.4} parent=0 // pred_check_branch
    %310 = sbr.rel (%p308) target = $region21
  $region20: #{discriminator_forward.4} parent=0 // pred_region
    %v311 = vld [vmem:[#allocation2] sm:$0xff]
    %v312 = vld [vmem:[#allocation2 + $0x8] sm:$0xff]
    %v313 = vld [vmem:[#allocation2 + $0x10] sm:$0xff]
    %v314 = vld [vmem:[#allocation2 + $0x18] sm:$0xff]
    %v315 = vld [vmem:[#allocation2 + $0x20] sm:$0xff]
    %v316 = vld [vmem:[#allocation2 + $0x28] sm:$0xff]
    %v317 = vld [vmem:[#allocation2 + $0x30] sm:$0xff]
    %v318 = vld [vmem:[#allocation2 + $0x38] sm:$0xff]
    %v319 = vld [vmem:[#allocation2 + $0x40] sm:$0xff]
    %v320 = vld [vmem:[#allocation2 + $0x48] sm:$0xff]
    %v321 = vld [vmem:[#allocation2 + $0x50] sm:$0xff]
    %v322 = vld [vmem:[#allocation2 + $0x58] sm:$0xff]
    %v323 = vld [vmem:[#allocation2 + $0x60] sm:$0xff]
    %v324 = vld [vmem:[#allocation2 + $0x68] sm:$0xff]
    %v325 = vld [vmem:[#allocation2 + $0x70] sm:$0xff]
    %v326 = vld [vmem:[#allocation2 + $0x78] sm:$0xff]
    %v327 = vld [vmem:[%s2] sm:$0x1]
    %v329 = vlaneseq
    %v330 = vshrl.u32 %v329, 7
    %v331 = vsub.s32 0, %v330
    %v332 = vrot.slane %v327, %v331
    %v334 = vadd.f32 %v311, %v332
    %v335 = vadd.f32 %v312, %v332
    %v336 = vadd.f32 %v313, %v332
    %v337 = vadd.f32 %v314, %v332
    %v338 = vadd.f32 %v315, %v332
    %v339 = vadd.f32 %v316, %v332
    %v340 = vadd.f32 %v317, %v332
    %v341 = vadd.f32 %v318, %v332
    %v342 = vadd.f32 %v319, %v332
    %v343 = vadd.f32 %v320, %v332
    %v344 = vadd.f32 %v321, %v332
    %v345 = vadd.f32 %v322, %v332
    %v346 = vadd.f32 %v323, %v332
    %v347 = vadd.f32 %v324, %v332
    %v348 = vadd.f32 %v325, %v332
    %v349 = vadd.f32 %v326, %v332
    %vm350 = vcmp.ge.f32.partialorder %v334, 0.0
    %vm351 = vcmp.ge.f32.partialorder %v335, 0.0
    %vm352 = vcmp.ge.f32.partialorder %v336, 0.0
    %vm353 = vcmp.ge.f32.partialorder %v337, 0.0
    %vm354 = vcmp.ge.f32.partialorder %v338, 0.0
    %vm355 = vcmp.ge.f32.partialorder %v339, 0.0
    %vm356 = vcmp.ge.f32.partialorder %v340, 0.0
    %vm357 = vcmp.ge.f32.partialorder %v341, 0.0
    %vm358 = vcmp.ge.f32.partialorder %v342, 0.0
    %vm359 = vcmp.ge.f32.partialorder %v343, 0.0
    %vm360 = vcmp.ge.f32.partialorder %v344, 0.0
    %vm361 = vcmp.ge.f32.partialorder %v345, 0.0
    %vm362 = vcmp.ge.f32.partialorder %v346, 0.0
    %vm363 = vcmp.ge.f32.partialorder %v347, 0.0
    %vm364 = vcmp.ge.f32.partialorder %v348, 0.0
    %vm365 = vcmp.ge.f32.partialorder %v349, 0.0
    %v366 = vmul.f32 %v334, 0.01
    %v367 = vmul.f32 %v335, 0.01
    %v368 = vmul.f32 %v336, 0.01
    %v369 = vmul.f32 %v337, 0.01
    %v370 = vmul.f32 %v338, 0.01
    %v371 = vmul.f32 %v339, 0.01
    %v372 = vmul.f32 %v340, 0.01
    %v373 = vmul.f32 %v341, 0.01
    %v374 = vmul.f32 %v342, 0.01
    %v375 = vmul.f32 %v343, 0.01
    %v376 = vmul.f32 %v344, 0.01
    %v377 = vmul.f32 %v345, 0.01
    %v378 = vmul.f32 %v346, 0.01
    %v379 = vmul.f32 %v347, 0.01
    %v380 = vmul.f32 %v348, 0.01
    %v381 = vmul.f32 %v349, 0.01
    %v382 = vsel %vm350, %v334, %v366
    %v383 = vsel %vm351, %v335, %v367
    %v384 = vsel %vm352, %v336, %v368
    %v385 = vsel %vm353, %v337, %v369
    %v386 = vsel %vm354, %v338, %v370
    %v387 = vsel %vm355, %v339, %v371
    %v388 = vsel %vm356, %v340, %v372
    %v389 = vsel %vm357, %v341, %v373
    %v390 = vsel %vm358, %v342, %v374
    %v391 = vsel %vm359, %v343, %v375
    %v392 = vsel %vm360, %v344, %v376
    %v393 = vsel %vm361, %v345, %v377
    %v394 = vsel %vm362, %v346, %v378
    %v395 = vsel %vm363, %v347, %v379
    %v396 = vsel %vm364, %v348, %v380
    %v397 = vsel %vm365, %v349, %v381
    %v398 = vpack.c.bf16 %v383, %v382
    %v399 = vpack.c.bf16 %v385, %v384
    %v400 = vpack.c.bf16 %v387, %v386
    %v401 = vpack.c.bf16 %v389, %v388
    %v402 = vpack.c.bf16 %v391, %v390
    %v403 = vpack.c.bf16 %v393, %v392
    %v404 = vpack.c.bf16 %v395, %v394
    %v405 = vpack.c.bf16 %v397, %v396
    %v414 = vunpack.c.l.b16 %v398
    %v415 = vunpack.c.h.b16 %v398
    %v416 = vunpack.c.l.b16 %v399
    %v417 = vunpack.c.h.b16 %v399
    %v418 = vunpack.c.l.b16 %v400
    %v419 = vunpack.c.h.b16 %v400
    %v420 = vunpack.c.l.b16 %v401
    %v421 = vunpack.c.h.b16 %v401
    %v422 = vunpack.c.l.b16 %v402
    %v423 = vunpack.c.h.b16 %v402
    %v424 = vunpack.c.l.b16 %v403
    %v425 = vunpack.c.h.b16 %v403
    %v426 = vunpack.c.l.b16 %v404
    %v427 = vunpack.c.h.b16 %v404
    %v428 = vunpack.c.l.b16 %v405
    %v429 = vunpack.c.h.b16 %v405
    %v430 = vpack.c.b16 %v414, %v414
    %v431 = vpack.c.b16 %v415, %v415
    %v432 = vpack.c.b16 %v416, %v416
    %v433 = vpack.c.b16 %v417, %v417
    %v434 = vpack.c.b16 %v418, %v418
    %v435 = vpack.c.b16 %v419, %v419
    %v436 = vpack.c.b16 %v420, %v420
    %v437 = vpack.c.b16 %v421, %v421
    %v438 = vpack.c.b16 %v422, %v422
    %v439 = vpack.c.b16 %v423, %v423
    %v440 = vpack.c.b16 %v424, %v424
    %v441 = vpack.c.b16 %v425, %v425
    %v442 = vpack.c.b16 %v426, %v426
    %v443 = vpack.c.b16 %v427, %v427
    %v444 = vpack.c.b16 %v428, %v428
    %v445 = vpack.c.b16 %v429, %v429
    %462 = vst [vmem:[%s3] sm:$0xf] %v430
    %463 = vst [vmem:[%s3 + $0x4] sm:$0xf] %v431
    %464 = vst [vmem:[%s3 + $0x8] sm:$0xf] %v432
    %465 = vst [vmem:[%s3 + $0xc] sm:$0xf] %v433
    %466 = vst [vmem:[%s3 + $0x10] sm:$0xf] %v434
    %467 = vst [vmem:[%s3 + $0x14] sm:$0xf] %v435
    %468 = vst [vmem:[%s3 + $0x18] sm:$0xf] %v436
    %469 = vst [vmem:[%s3 + $0x1c] sm:$0xf] %v437
    %470 = vst [vmem:[%s3 + $0x20] sm:$0xf] %v438
    %471 = vst [vmem:[%s3 + $0x24] sm:$0xf] %v439
    %472 = vst [vmem:[%s3 + $0x28] sm:$0xf] %v440
    %473 = vst [vmem:[%s3 + $0x2c] sm:$0xf] %v441
    %474 = vst [vmem:[%s3 + $0x30] sm:$0xf] %v442
    %475 = vst [vmem:[%s3 + $0x34] sm:$0xf] %v443
    %476 = vst [vmem:[%s3 + $0x38] sm:$0xf] %v444
    %477 = vst [vmem:[%s3 + $0x3c] sm:$0xf] %v445
  $region21: #{discriminator_forward.4} parent=0 // pred_fallthru
    _
  // Predicated region
  $region22: #{discriminator_forward.4} parent=0 // pred_check
    _
  $region23: #{discriminator_forward.4} parent=0 // pred_check_branch
    %479 = sbr.rel (0) target = $region25
  $region24: #{discriminator_forward.4} parent=0 // pred_region
    _
  $region25: #{discriminator_forward.4} parent=0 // pred_fallthru
    _
  // Predicated region
  $region26: #{discriminator_forward.4} parent=0 // pred_check
    _
  $region27: #{discriminator_forward.4} parent=0 // pred_check_branch
    %481 = sbr.rel (0) target = $region29
  $region28: #{discriminator_forward.4} parent=0 // pred_region
    _
  $region29: #{discriminator_forward.4} parent=0 // pred_fallthru
    _

// kernel: discriminator_forward.5
$region0: #{discriminator_forward.5}
  #allocation0 [shape = 'u32[]', space=smem, size = 0x4, offset = 0x4, fixed_abs, tag = 'smem constant byte address 0x4 - core index']
  #allocation1 [shape = 'u32[144,128]{1,0:T(1,128)}', space=vmem, size = 0x12000, scoped, tag = 'internal scratch']
  #allocation2 [shape = 'f32[32,128]{1,0:T(8,128)}', space=vmem, size = 0x4000, scoped, tag = 'scratch operand']
  %s0 = inlined_call_operand.vmem [shape: bf16[32,128], index: 0, kind: input, shape index: {}]
  %s1 = inlined_call_operand.vmem [shape: bf16[128,128], index: 1, kind: input, shape index: {}]
  %s2 = inlined_call_operand.vmem [shape: f32[1,128], index: 2, kind: input, shape index: {}]
  %s3 = inlined_call_operand.vmem [shape: bf16[32,128], index: 3, kind: output, shape index: {}]
  %s4 = sld [smem:[#allocation0]]
  $region30: #{discriminator_forward.5} parent=0
    _
  %s6 = ssub.s32 1, %s4
  %s7 = scalar_select 0, %s6, %s4
  // Predicated region
  $region2: #{discriminator_forward.5} parent=0 // pred_check
    _
  $region3: #{discriminator_forward.5} parent=0 // pred_check_branch
    %9 = sbr.rel (0) target = $region5
  $region4: #{discriminator_forward.5} parent=0 // pred_region
    _
  $region5: #{discriminator_forward.5} parent=0 // pred_fallthru
    _
  // Predicated region
  $region6: #{discriminator_forward.5} parent=0 // pred_check
    _
  $region7: #{discriminator_forward.5} parent=0 // pred_check_branch
    %11 = sbr.rel (0) target = $region9
  $region8: #{discriminator_forward.5} parent=0 // pred_region
    _
  $region9: #{discriminator_forward.5} parent=0 // pred_fallthru
    _
  // Predicated region
  $region10: #{discriminator_forward.5} parent=0 // pred_check
    _
  $region11: #{discriminator_forward.5} parent=0 // pred_check_branch
    %13 = sbr.rel (0) target = $region13
  $region12: #{discriminator_forward.5} parent=0 // pred_region
    _
  $region13: #{discriminator_forward.5} parent=0 // pred_fallthru
    _
  %p15 = scmp.eq.s32.totalorder 0, 0
  // Predicated region
  $region14: #{discriminator_forward.5} parent=0 // pred_check
    %p16 = pneg %p15
  $region15: #{discriminator_forward.5} parent=0 // pred_check_branch
    %18 = sbr.rel (%p16) target = $region17
  $region16: #{discriminator_forward.5} parent=0 // pred_region
    %19 = vst [vmem:[#allocation2] sm:$0xff] 0.0
    %20 = vst [vmem:[#allocation2 + $0x8] sm:$0xff] 0.0
    %21 = vst [vmem:[#allocation2 + $0x10] sm:$0xff] 0.0
    %22 = vst [vmem:[#allocation2 + $0x18] sm:$0xff] 0.0
  $region17: #{discriminator_forward.5} parent=0 // pred_fallthru
    _
  %v23 = vld [vmem:[%s1] sm:$0xf]
  %v24 = vld [vmem:[%s1 + $0x4] sm:$0xf]
  %v25 = vld [vmem:[%s1 + $0x8] sm:$0xf]
  %v26 = vld [vmem:[%s1 + $0xc] sm:$0xf]
  %v27 = vld [vmem:[%s1 + $0x10] sm:$0xf]
  %v28 = vld [vmem:[%s1 + $0x14] sm:$0xf]
  %v29 = vld [vmem:[%s1 + $0x18] sm:$0xf]
  %v30 = vld [vmem:[%s1 + $0x1c] sm:$0xf]
  %v31 = vld [vmem:[%s1 + $0x20] sm:$0xf]
  %v32 = vld [vmem:[%s1 + $0x24] sm:$0xf]
  %v33 = vld [vmem:[%s1 + $0x28] sm:$0xf]
  %v34 = vld [vmem:[%s1 + $0x2c] sm:$0xf]
  %v35 = vld [vmem:[%s1 + $0x30] sm:$0xf]
  %v36 = vld [vmem:[%s1 + $0x34] sm:$0xf]
  %v37 = vld [vmem:[%s1 + $0x38] sm:$0xf]
  %v38 = vld [vmem:[%s1 + $0x3c] sm:$0xf]
  %v39 = vld [vmem:[#allocation2] sm:$0xff]
  %v40 = vld [vmem:[#allocation2 + $0x8] sm:$0xff]
  %v41 = vld [vmem:[#allocation2 + $0x10] sm:$0xff]
  %v42 = vld [vmem:[#allocation2 + $0x18] sm:$0xff]
  %v43 = vld [vmem:[%s0] sm:$0xf]
  %v44 = vld [vmem:[%s0 + $0x4] sm:$0xf]
  %v45 = vld [vmem:[%s0 + $0x8] sm:$0xf]
  %v46 = vld [vmem:[%s0 + $0xc] sm:$0xf]
  %v51 = vunpack.c.l.b16 %v43
  %v52 = vunpack.c.l.b16 %v44
  %v53 = vunpack.c.l.b16 %v45
  %v54 = vunpack.c.l.b16 %v46
  %v55 = vpack.c.b16 %v52, %v51
  %v56 = vpack.c.b16 %v54, %v53
  %v75 = vunpack.c.l.b16 %v23
  %v76 = vunpack.c.l.b16 %v24
  %v77 = vunpack.c.l.b16 %v25
  %v78 = vunpack.c.l.b16 %v26
  %v79 = vunpack.c.l.b16 %v27
  %v80 = vunpack.c.l.b16 %v28
  %v81 = vunpack.c.l.b16 %v29
  %v82 = vunpack.c.l.b16 %v30
  %v83 = vunpack.c.l.b16 %v31
  %v84 = vunpack.c.l.b16 %v32
  %v85 = vunpack.c.l.b16 %v33
  %v86 = vunpack.c.l.b16 %v34
  %v87 = vunpack.c.l.b16 %v35
  %v88 = vunpack.c.l.b16 %v36
  %v89 = vunpack.c.l.b16 %v37
  %v90 = vunpack.c.l.b16 %v38
  %v91 = vpack.c.b16 %v76, %v75
  %v92 = vpack.c.b16 %v78, %v77
  %v93 = vpack.c.b16 %v80, %v79
  %v94 = vpack.c.b16 %v82, %v81
  %v95 = vpack.c.b16 %v84, %v83
  %v96 = vpack.c.b16 %v86, %v85
  %v97 = vpack.c.b16 %v88, %v87
  %v98 = vpack.c.b16 %v90, %v89
  %107 = vmatprep.subr.bf16.mxu0 0
  %108 = vmatpush1.bf16.msra.mxu0 %v98
  %109 = vmatprep.subr.bf16.mxu0 0
  %110 = vmatpush1.bf16.msra.mxu0 %v97
  %111 = vmatprep.subr.bf16.mxu0 0
  %112 = vmatpush1.bf16.msra.mxu0 %v96
  %113 = vmatprep.subr.bf16.mxu0 0
  %114 = vmatpush1.bf16.msra.mxu0 %v95
  %115 = vmatprep.subr.bf16.mxu0 0
  %116 = vmatpush1.bf16.msra.mxu0 %v94
  %117 = vmatprep.subr.bf16.mxu0 0
  %118 = vmatpush1.bf16.msra.mxu0 %v93
  %119 = vmatprep.subr.bf16.mxu0 0
  %120 = vmatpush1.bf16.msra.mxu0 %v92
  %121 = vmatprep.subr.bf16.mxu0 0
  %122 = vmatpush1.bf16.msra.mxu0 %v91
  %123 = vmatprep.subr.bf16.mxu0 0
  %124 = vmatpush2.bf16.msra.mxu0 0
  %125 = vmatprep.subr.bf16.mxu0 0
  %126 = vmatpush2.bf16.msra.mxu0 0
  %127 = vmatprep.subr.bf16.mxu0 0
  %128 = vmatpush2.bf16.msra.mxu0 0
  %129 = vmatprep.subr.bf16.mxu0 0
  %130 = vmatpush2.bf16.msra.mxu0 0
  %131 = vmatprep.subr.bf16.mxu0 0
  %132 = vmatpush2.bf16.msra.mxu0 0
  %133 = vmatprep.subr.bf16.mxu0 0
  %134 = vmatpush2.bf16.msra.mxu0 0
  %135 = vmatprep.subr.bf16.mxu0 0
  %136 = vmatpush2.bf16.msra.mxu0 0
  %137 = vmatprep.subr.bf16.mxu0 0
  %138 = vmatpush2.bf16.msra.mxu0 0
  %139 = vmatprep.mubr.bf16.mxu0 0
  %140 = vmatmul.mubr.bf16.gmra.mxu0 %v55
  %v141 = vpop.f32.mrf.mxu0
  %v142 = vadd.f32 0.0, %v141
  %v143 = vpop.f32.mrf.mxu0
  %v144 = vpop.f32.mrf.mxu0
  %v145 = vadd.f32 0.0, %v144
  %v146 = vpop.f32.mrf.mxu0
  %147 = vmatprep.mubr.bf16.mxu0 0
  %148 = vmatmul.mubr.bf16.gmra.mxu0 %v56
  %v149 = vpop.f32.mrf.mxu0
  %v150 = vadd.f32 0.0, %v149
  %v151 = vpop.f32.mrf.mxu0
  %v152 = vpop.f32.mrf.mxu0
  %v153 = vadd.f32 0.0, %v152
  %v154 = vpop.f32.mrf.mxu0
  %155 = vdwg.mxu0
  %v156 = vadd.f32 %v39, %v142
  %v157 = vadd.f32 %v40, %v145
  %v158 = vadd.f32 %v41, %v150
  %v159 = vadd.f32 %v42, %v153
  %160 = vst [vmem:[#allocation2] sm:$0xff] %v156
  %161 = vst [vmem:[#allocation2 + $0x8] sm:$0xff] %v157
  %162 = vst [vmem:[#allocation2 + $0x10] sm:$0xff] %v158
  %163 = vst [vmem:[#allocation2 + $0x18] sm:$0xff] %v159
  // Predicated region
  $region18: #{discriminator_forward.5} parent=0 // pred_check
    %p164 = pneg %p15
  $region19: #{discriminator_forward.5} parent=0 // pred_check_branch
    %166 = sbr.rel (%p164) target = $region21
  $region20: #{discriminator_forward.5} parent=0 // pred_region
    %v167 = vld [vmem:[#allocation2] sm:$0xff]
    %v168 = vld [vmem:[#allocation2 + $0x8] sm:$0xff]
    %v169 = vld [vmem:[#allocation2 + $0x10] sm:$0xff]
    %v170 = vld [vmem:[#allocation2 + $0x18] sm:$0xff]
    %v171 = vld [vmem:[%s2] sm:$0x1]
    %v173 = vlaneseq
    %v174 = vshrl.u32 %v173, 7
    %v175 = vsub.s32 0, %v174
    %v176 = vrot.slane %v171, %v175
    %v178 = vadd.f32 %v167, %v176
    %v179 = vadd.f32 %v168, %v176
    %v180 = vadd.f32 %v169, %v176
    %v181 = vadd.f32 %v170, %v176
    %vm182 = vcmp.ge.f32.partialorder %v178, 0.0
    %vm183 = vcmp.ge.f32.partialorder %v179, 0.0
    %vm184 = vcmp.ge.f32.partialorder %v180, 0.0
    %vm185 = vcmp.ge.f32.partialorder %v181, 0.0
    %v186 = vmul.f32 %v178, 0.01
    %v187 = vmul.f32 %v179, 0.01
    %v188 = vmul.f32 %v180, 0.01
    %v189 = vmul.f32 %v181, 0.01
    %v190 = vsel %vm182, %v178, %v186
    %v191 = vsel %vm183, %v179, %v187
    %v192 = vsel %vm184, %v180, %v188
    %v193 = vsel %vm185, %v181, %v189
    %v194 = vpack.c.bf16 %v191, %v190
    %v195 = vpack.c.bf16 %v193, %v192
    %v198 = vunpack.c.l.b16 %v194
    %v199 = vunpack.c.h.b16 %v194
    %v200 = vunpack.c.l.b16 %v195
    %v201 = vunpack.c.h.b16 %v195
    %v202 = vpack.c.b16 %v198, %v198
    %v203 = vpack.c.b16 %v199, %v199
    %v204 = vpack.c.b16 %v200, %v200
    %v205 = vpack.c.b16 %v201, %v201
    %210 = vst [vmem:[%s3] sm:$0xf] %v202
    %211 = vst [vmem:[%s3 + $0x4] sm:$0xf] %v203
    %212 = vst [vmem:[%s3 + $0x8] sm:$0xf] %v204
    %213 = vst [vmem:[%s3 + $0xc] sm:$0xf] %v205
  $region21: #{discriminator_forward.5} parent=0 // pred_fallthru
    _
  // Predicated region
  $region22: #{discriminator_forward.5} parent=0 // pred_check
    _
  $region23: #{discriminator_forward.5} parent=0 // pred_check_branch
    %215 = sbr.rel (0) target = $region25
  $region24: #{discriminator_forward.5} parent=0 // pred_region
    _
  $region25: #{discriminator_forward.5} parent=0 // pred_fallthru
    _
  // Predicated region
  $region26: #{discriminator_forward.5} parent=0 // pred_check
    _
  $region27: #{discriminator_forward.5} parent=0 // pred_check_branch
    %217 = sbr.rel (0) target = $region29
  $region28: #{discriminator_forward.5} parent=0 // pred_region
    _
  $region29: #{discriminator_forward.5} parent=0 // pred_fallthru
    _

// kernel: discriminator_forward.6
$region0: #{discriminator_forward.6}
  #allocation0 [shape = 'u32[]', space=smem, size = 0x4, offset = 0x4, fixed_abs, tag = 'smem constant byte address 0x4 - core index']
  #allocation1 [shape = 'u32[144,128]{1,0:T(1,128)}', space=vmem, size = 0x12000, scoped, tag = 'internal scratch']
  #allocation2 [shape = 'f32[8,128]{1,0:T(8,128)}', space=vmem, size = 0x1000, scoped, tag = 'scratch operand']
  %s0 = inlined_call_operand.vmem [shape: bf16[8,256], index: 0, kind: input, shape index: {}]
  %s1 = inlined_call_operand.vmem [shape: bf16[256,128], index: 1, kind: input, shape index: {}]
  %s2 = inlined_call_operand.vmem [shape: f32[1,128], index: 2, kind: input, shape index: {}]
  %s3 = inlined_call_operand.vmem [shape: bf16[8,128], index: 3, kind: output, shape index: {}]
  %s4 = sld [smem:[#allocation0]]
  $region30: #{discriminator_forward.6} parent=0
    _
  %s6 = ssub.s32 1, %s4
  %s7 = scalar_select 0, %s6, %s4
  // Predicated region
  $region2: #{discriminator_forward.6} parent=0 // pred_check
    _
  $region3: #{discriminator_forward.6} parent=0 // pred_check_branch
    %9 = sbr.rel (0) target = $region5
  $region4: #{discriminator_forward.6} parent=0 // pred_region
    _
  $region5: #{discriminator_forward.6} parent=0 // pred_fallthru
    _
  // Predicated region
  $region6: #{discriminator_forward.6} parent=0 // pred_check
    _
  $region7: #{discriminator_forward.6} parent=0 // pred_check_branch
    %11 = sbr.rel (0) target = $region9
  $region8: #{discriminator_forward.6} parent=0 // pred_region
    _
  $region9: #{discriminator_forward.6} parent=0 // pred_fallthru
    _
  // Predicated region
  $region10: #{discriminator_forward.6} parent=0 // pred_check
    _
  $region11: #{discriminator_forward.6} parent=0 // pred_check_branch
    %13 = sbr.rel (0) target = $region13
  $region12: #{discriminator_forward.6} parent=0 // pred_region
    _
  $region13: #{discriminator_forward.6} parent=0 // pred_fallthru
    _
  %p15 = scmp.eq.s32.totalorder 0, 0
  // Predicated region
  $region14: #{discriminator_forward.6} parent=0 // pred_check
    %p16 = pneg %p15
  $region15: #{discriminator_forward.6} parent=0 // pred_check_branch
    %18 = sbr.rel (%p16) target = $region17
  $region16: #{discriminator_forward.6} parent=0 // pred_region
    %19 = vst [vmem:[#allocation2] sm:$0xff] 0.0
  $region17: #{discriminator_forward.6} parent=0 // pred_fallthru
    _
  %v20 = vld [vmem:[%s1] sm:$0xf]
  %v21 = vld [vmem:[%s1 + $0x4] sm:$0xf]
  %v22 = vld [vmem:[%s1 + $0x8] sm:$0xf]
  %v23 = vld [vmem:[%s1 + $0xc] sm:$0xf]
  %v24 = vld [vmem:[%s1 + $0x10] sm:$0xf]
  %v25 = vld [vmem:[%s1 + $0x14] sm:$0xf]
  %v26 = vld [vmem:[%s1 + $0x18] sm:$0xf]
  %v27 = vld [vmem:[%s1 + $0x1c] sm:$0xf]
  %v28 = vld [vmem:[%s1 + $0x20] sm:$0xf]
  %v29 = vld [vmem:[%s1 + $0x24] sm:$0xf]
  %v30 = vld [vmem:[%s1 + $0x28] sm:$0xf]
  %v31 = vld [vmem:[%s1 + $0x2c] sm:$0xf]
  %v32 = vld [vmem:[%s1 + $0x30] sm:$0xf]
  %v33 = vld [vmem:[%s1 + $0x34] sm:$0xf]
  %v34 = vld [vmem:[%s1 + $0x38] sm:$0xf]
  %v35 = vld [vmem:[%s1 + $0x3c] sm:$0xf]
  %v36 = vld [vmem:[%s1 + $0x40] sm:$0xf]
  %v37 = vld [vmem:[%s1 + $0x44] sm:$0xf]
  %v38 = vld [vmem:[%s1 + $0x48] sm:$0xf]
  %v39 = vld [vmem:[%s1 + $0x4c] sm:$0xf]
  %v40 = vld [vmem:[%s1 + $0x50] sm:$0xf]
  %v41 = vld [vmem:[%s1 + $0x54] sm:$0xf]
  %v42 = vld [vmem:[%s1 + $0x58] sm:$0xf]
  %v43 = vld [vmem:[%s1 + $0x5c] sm:$0xf]
  %v44 = vld [vmem:[%s1 + $0x60] sm:$0xf]
  %v45 = vld [vmem:[%s1 + $0x64] sm:$0xf]
  %v46 = vld [vmem:[%s1 + $0x68] sm:$0xf]
  %v47 = vld [vmem:[%s1 + $0x6c] sm:$0xf]
  %v48 = vld [vmem:[%s1 + $0x70] sm:$0xf]
  %v49 = vld [vmem:[%s1 + $0x74] sm:$0xf]
  %v50 = vld [vmem:[%s1 + $0x78] sm:$0xf]
  %v51 = vld [vmem:[%s1 + $0x7c] sm:$0xf]
  %v52 = vld [vmem:[#allocation2] sm:$0xff]
  %v53 = vld [vmem:[%s0] sm:$0xff]
  %v55 = vunpack.c.l.b16 %v53
  %v56 = vunpack.c.h.b16 %v53
  %v57 = vpack.c.b16 %v55, %v55
  %v58 = vpack.c.b16 %v56, %v56
  %v93 = vunpack.c.l.b16 %v20
  %v94 = vunpack.c.l.b16 %v21
  %v95 = vunpack.c.l.b16 %v22
  %v96 = vunpack.c.l.b16 %v23
  %v97 = vunpack.c.l.b16 %v24
  %v98 = vunpack.c.l.b16 %v25
  %v99 = vunpack.c.l.b16 %v26
  %v100 = vunpack.c.l.b16 %v27
  %v101 = vunpack.c.l.b16 %v28
  %v102 = vunpack.c.l.b16 %v29
  %v103 = vunpack.c.l.b16 %v30
  %v104 = vunpack.c.l.b16 %v31
  %v105 = vunpack.c.l.b16 %v32
  %v106 = vunpack.c.l.b16 %v33
  %v107 = vunpack.c.l.b16 %v34
  %v108 = vunpack.c.l.b16 %v35
  %v109 = vunpack.c.l.b16 %v36
  %v110 = vunpack.c.l.b16 %v37
  %v111 = vunpack.c.l.b16 %v38
  %v112 = vunpack.c.l.b16 %v39
  %v113 = vunpack.c.l.b16 %v40
  %v114 = vunpack.c.l.b16 %v41
  %v115 = vunpack.c.l.b16 %v42
  %v116 = vunpack.c.l.b16 %v43
  %v117 = vunpack.c.l.b16 %v44
  %v118 = vunpack.c.l.b16 %v45
  %v119 = vunpack.c.l.b16 %v46
  %v120 = vunpack.c.l.b16 %v47
  %v121 = vunpack.c.l.b16 %v48
  %v122 = vunpack.c.l.b16 %v49
  %v123 = vunpack.c.l.b16 %v50
  %v124 = vunpack.c.l.b16 %v51
  %v125 = vpack.c.b16 %v94, %v93
  %v126 = vpack.c.b16 %v96, %v95
  %v127 = vpack.c.b16 %v98, %v97
  %v128 = vpack.c.b16 %v100, %v99
  %v129 = vpack.c.b16 %v102, %v101
  %v130 = vpack.c.b16 %v104, %v103
  %v131 = vpack.c.b16 %v106, %v105
  %v132 = vpack.c.b16 %v108, %v107
  %v133 = vpack.c.b16 %v110, %v109
  %v134 = vpack.c.b16 %v112, %v111
  %v135 = vpack.c.b16 %v114, %v113
  %v136 = vpack.c.b16 %v116, %v115
  %v137 = vpack.c.b16 %v118, %v117
  %v138 = vpack.c.b16 %v120, %v119
  %v139 = vpack.c.b16 %v122, %v121
  %v140 = vpack.c.b16 %v124, %v123
  %157 = vmatprep.subr.bf16.mxu0 0
  %158 = vmatpush1.bf16.msra.mxu0 %v132
  %159 = vmatprep.subr.bf16.mxu0 0
  %160 = vmatpush1.bf16.msra.mxu0 %v131
  %161 = vmatprep.subr.bf16.mxu0 0
  %162 = vmatpush1.bf16.msra.mxu0 %v130
  %163 = vmatprep.subr.bf16.mxu0 0
  %164 = vmatpush1.bf16.msra.mxu0 %v129
  %165 = vmatprep.subr.bf16.mxu0 0
  %166 = vmatpush1.bf16.msra.mxu0 %v128
  %167 = vmatprep.subr.bf16.mxu0 0
  %168 = vmatpush1.bf16.msra.mxu0 %v127
  %169 = vmatprep.subr.bf16.mxu0 0
  %170 = vmatpush1.bf16.msra.mxu0 %v126
  %171 = vmatprep.subr.bf16.mxu0 0
  %172 = vmatpush1.bf16.msra.mxu0 %v125
  %173 = vmatprep.subr.bf16.mxu0 0
  %174 = vmatpush2.bf16.msra.mxu0 %v140
  %175 = vmatprep.subr.bf16.mxu0 0
  %176 = vmatpush2.bf16.msra.mxu0 %v139
  %177 = vmatprep.subr.bf16.mxu0 0
  %178 = vmatpush2.bf16.msra.mxu0 %v138
  %179 = vmatprep.subr.bf16.mxu0 0
  %180 = vmatpush2.bf16.msra.mxu0 %v137
  %181 = vmatprep.subr.bf16.mxu0 0
  %182 = vmatpush2.bf16.msra.mxu0 %v136
  %183 = vmatprep.subr.bf16.mxu0 0
  %184 = vmatpush2.bf16.msra.mxu0 %v135
  %185 = vmatprep.subr.bf16.mxu0 0
  %186 = vmatpush2.bf16.msra.mxu0 %v134
  %187 = vmatprep.subr.bf16.mxu0 0
  %188 = vmatpush2.bf16.msra.mxu0 %v133
  %189 = vmatprep.mubr.bf16.mxu0 %v58
  %190 = vmatmul.mubr.bf16.gmra.mxu0 %v57
  %v191 = vpop.f32.mrf.mxu0
  %v192 = vadd.f32 0.0, %v191
  %v193 = vpop.f32.mrf.mxu0
  %v194 = vpop.f32.mrf.mxu0
  %v195 = vpop.f32.mrf.mxu0
  %196 = vdwg.mxu0
  %v197 = vadd.f32 %v52, %v192
  %198 = vst [vmem:[#allocation2] sm:$0xff] %v197
  // Predicated region
  $region18: #{discriminator_forward.6} parent=0 // pred_check
    %p199 = pneg %p15
  $region19: #{discriminator_forward.6} parent=0 // pred_check_branch
    %201 = sbr.rel (%p199) target = $region21
  $region20: #{discriminator_forward.6} parent=0 // pred_region
    %v202 = vld [vmem:[#allocation2] sm:$0xff]
    %v203 = vld [vmem:[%s2] sm:$0x1]
    %v205 = vlaneseq
    %v206 = vshrl.u32 %v205, 7
    %v207 = vsub.s32 0, %v206
    %v208 = vrot.slane %v203, %v207
    %v210 = vadd.f32 %v202, %v208
    %vm211 = vcmp.ge.f32.partialorder %v210, 0.0
    %v212 = vmul.f32 %v210, 0.01
    %v213 = vsel %vm211, %v210, %v212
    %v214 = vpack.c.bf16 %v213, %v213
    %215 = vst [vmem:[%s3] sm:$0xf] %v214
  $region21: #{discriminator_forward.6} parent=0 // pred_fallthru
    _
  // Predicated region
  $region22: #{discriminator_forward.6} parent=0 // pred_check
    _
  $region23: #{discriminator_forward.6} parent=0 // pred_check_branch
    %217 = sbr.rel (0) target = $region25
  $region24: #{discriminator_forward.6} parent=0 // pred_region
    _
  $region25: #{discriminator_forward.6} parent=0 // pred_fallthru
    _
  // Predicated region
  $region26: #{discriminator_forward.6} parent=0 // pred_check
    _
  $region27: #{discriminator_forward.6} parent=0 // pred_check_branch
    %219 = sbr.rel (0) target = $region29
  $region28: #{discriminator_forward.6} parent=0 // pred_region
    _
  $region29: #{discriminator_forward.6} parent=0 // pred_fallthru
    _

// kernel: discriminator_forward.7
$region0: #{discriminator_forward.7}
  #allocation0 [shape = 'u32[]', space=smem, size = 0x4, offset = 0x4, fixed_abs, tag = 'smem constant byte address 0x4 - core index']
  #allocation1 [shape = 'u32[144,128]{1,0:T(1,128)}', space=vmem, size = 0x12000, scoped, tag = 'internal scratch']
  #allocation2 [shape = 'f32[8,128]{1,0:T(8,128)}', space=vmem, size = 0x1000, scoped, tag = 'scratch operand']
  %s0 = inlined_call_operand.vmem [shape: bf16[8,1152], index: 0, kind: input, shape index: {}]
  %s1 = inlined_call_operand.vmem [shape: bf16[1152,128], index: 1, kind: input, shape index: {}]
  %s2 = inlined_call_operand.vmem [shape: f32[1,128], index: 2, kind: input, shape index: {}]
  %s3 = inlined_call_operand.vmem [shape: f32[8,128], index: 3, kind: output, shape index: {}]
  %s4 = sld [smem:[#allocation0]]
  $region53: #{discriminator_forward.7} parent=0
    _
  %s6 = ssub.s32 1, %s4
  %s7 = scalar_select 0, %s6, %s4
  loop: start=0, step=1, limit=5
  $region2: #{discriminator_forward.7} parent=0 // loop_pre_header
    _
  $region3: #{discriminator_forward.7} parent=0 // loop_header
    %s9 = sphi 0, %s13
    %p10 = scmp.ge.s32.totalorder %s9, 5
    %s16 = sphi 0, %s35
    %s17 = sphi 0, %s31
    %s18 = sphi 0, %s27
    %s19 = sphi 0, %s16
    %s20 = sphi 0, %s17
    %s21 = sphi 0, %s18
    %s22 = sphi 0, %s19
    %s23 = sphi 0, %s20
    %s24 = sphi 0, %s21
    %s40 = sphi 0, %s42
    %s43 = sphi 0, %s40
    %s44 = sphi 0, %s43
    %s60 = sphi 0, %s44
    %s68 = sphi 0, %s70
    %s71 = sphi 0, %s68
    %s72 = sphi 0, %s71
    %s88 = sphi 0, %s72
    %s94 = sphi 0, %s96
    %s97 = sphi 0, %s94
    %s98 = sphi 0, %s97
    %s114 = sphi 0, %s98
    %s122 = sphi 0, %s124
    %s125 = sphi 0, %s122
    %s126 = sphi 0, %s125
    %s142 = sphi 0, %s126
  $region4: #{discriminator_forward.7} parent=0 // loop_header_branch
    %12 = sbr.rel (%p10) target = $region8
  $region5: #{discriminator_forward.7} parent=0 // loop_body
    %s14 = ssub.s32 %s9, 1
    %s15 = ssub.s32 %s9, 2
    %s25 = sadd.s32 1, %s18
    %p26 = scmp.ge.s32.totalorder %s25, 3
    %s27 = scalar_select %p26, 0, %s25
    %s28 = sadd.s32 1, %s17
    %s29 = scalar_select %p26, %s28, %s17
    %p30 = scmp.ge.s32.totalorder %s29, 1
    %s31 = scalar_select %p30, 0, %s29
    %s32 = sadd.s32 1, %s16
    %s33 = scalar_select %p30, %s32, %s16
    %p34 = scmp.ge.s32.totalorder %s33, 1
    %s35 = scalar_select %p34, 0, %s33
    %s36 = ssub.s32 %s16, %s35
    %s37 = ssub.s32 %s18, %s27
    %s38 = sor.u32 %s36, %s37
    %p39 = scmp.eq.s32.totalorder %s38, 0
    %s41 = sadd.s32 %s40, 1
    %s42 = scalar_select %p39, %s40, %s41
    %p45 = pneg %p39
    %p46 = scmp.eq.s32.totalorder %s9, 2
    %p47 = por %p45, %p46
    %p48 = scmp.ne.s32.totalorder %s40, %s43
    %p49 = scmp.eq.s32.totalorder %s9, 0
    %p50 = por %p48, %p49
    %p51 = scmp.ne.s32.totalorder %s40, %s43
    %p52 = scmp.eq.s32.totalorder %s14, 2
    %p53 = por %p51, %p52
    %p54 = scmp.ne.s32.totalorder %s43, %s44
    %p55 = scmp.eq.s32.totalorder %s14, 0
    %p56 = por %p54, %p55
    %p57 = scmp.ne.s32.totalorder %s43, %s44
    %p58 = scmp.eq.s32.totalorder %s15, 2
    %p59 = por %p57, %p58
    %p61 = scmp.ne.s32.totalorder %s44, %s60
    %p62 = scmp.eq.s32.totalorder %s15, 0
    %p63 = por %p61, %p62
    %s64 = ssub.s32 %s18, %s27
    %s65 = ssub.s32 %s17, %s31
    %s66 = sor.u32 %s64, %s65
    %p67 = scmp.eq.s32.totalorder %s66, 0
    %s69 = sadd.s32 %s68, 1
    %s70 = scalar_select %p67, %s68, %s69
    %p73 = pneg %p67
    %p74 = scmp.eq.s32.totalorder %s9, 2
    %p75 = por %p73, %p74
    %p76 = scmp.ne.s32.totalorder %s68, %s71
    %p77 = scmp.eq.s32.totalorder %s9, 0
    %p78 = por %p76, %p77
    %p79 = scmp.ne.s32.totalorder %s68, %s71
    %p80 = scmp.eq.s32.totalorder %s14, 2
    %p81 = por %p79, %p80
    %p82 = scmp.ne.s32.totalorder %s71, %s72
    %p83 = scmp.eq.s32.totalorder %s14, 0
    %p84 = por %p82, %p83
    %p85 = scmp.ne.s32.totalorder %s71, %s72
    %p86 = scmp.eq.s32.totalorder %s15, 2
    %p87 = por %p85, %p86
    %p89 = scmp.ne.s32.totalorder %s72, %s88
    %p90 = scmp.eq.s32.totalorder %s15, 0
    %p91 = por %p89, %p90
    %s92 = ssub.s32 %s17, %s31
    %p93 = scmp.eq.s32.totalorder %s92, 0
    %s95 = sadd.s32 %s94, 1
    %s96 = scalar_select %p93, %s94, %s95
    %p99 = pneg %p93
    %p100 = scmp.eq.s32.totalorder %s9, 2
    %p101 = por %p99, %p100
    %p102 = scmp.ne.s32.totalorder %s94, %s97
    %p103 = scmp.eq.s32.totalorder %s9, 0
    %p104 = por %p102, %p103
    %p105 = scmp.ne.s32.totalorder %s94, %s97
    %p106 = scmp.eq.s32.totalorder %s14, 2
    %p107 = por %p105, %p106
    %p108 = scmp.ne.s32.totalorder %s97, %s98
    %p109 = scmp.eq.s32.totalorder %s14, 0
    %p110 = por %p108, %p109
    %p111 = scmp.ne.s32.totalorder %s97, %s98
    %p112 = scmp.eq.s32.totalorder %s15, 2
    %p113 = por %p111, %p112
    %p115 = scmp.ne.s32.totalorder %s98, %s114
    %p116 = scmp.eq.s32.totalorder %s15, 0
    %p117 = por %p115, %p116
    %s118 = ssub.s32 %s16, %s35
    %s119 = ssub.s32 %s17, %s31
    %s120 = sor.u32 %s118, %s119
    %p121 = scmp.eq.s32.totalorder %s120, 0
    %s123 = sadd.s32 %s122, 1
    %s124 = scalar_select %p121, %s122, %s123
    %p127 = pneg %p121
    %p128 = scmp.eq.s32.totalorder %s9, 2
    %p129 = por %p127, %p128
    %p130 = scmp.ne.s32.totalorder %s122, %s125
    %p131 = scmp.eq.s32.totalorder %s9, 0
    %p132 = por %p130, %p131
    %p133 = scmp.ne.s32.totalorder %s122, %s125
    %p134 = scmp.eq.s32.totalorder %s14, 2
    %p135 = por %p133, %p134
    %p136 = scmp.ne.s32.totalorder %s125, %s126
    %p137 = scmp.eq.s32.totalorder %s14, 0
    %p138 = por %p136, %p137
    %p139 = scmp.ne.s32.totalorder %s125, %s126
    %p140 = scmp.eq.s32.totalorder %s15, 2
    %p141 = por %p139, %p140
    %p143 = scmp.ne.s32.totalorder %s126, %s142
    %p144 = scmp.eq.s32.totalorder %s15, 0
    %p145 = por %p143, %p144
    %p146 = scmp.le.s32.totalorder 1, %s9
    %p147 = scmp.lt.s32.totalorder %s9, 4
    %p148 = pnand %p146, %p147
    %p149 = pneg %p148
    // Predicated region
    $region9: #{discriminator_forward.7} parent=5 // pred_check
      _
    $region10: #{discriminator_forward.7} parent=5 // pred_check_branch
      %151 = sbr.rel (%p148) target = $region12
    $region11: #{discriminator_forward.7} parent=5 // pred_region
      %s152 = ssub.s32 %s9, 1
      // Predicated region
      $region13: #{discriminator_forward.7} parent=11 // pred_check
        %p153 = pneg %p110
      $region14: #{discriminator_forward.7} parent=11 // pred_check_branch
        %155 = sbr.rel (%p153) target = $region16
      $region15: #{discriminator_forward.7} parent=11 // pred_region
        %p156 = scmp.lt.s32.totalorder %s20, 0
        %s157 = scalar_select %p156, %s20, 0
        %s158 = scalar_lea.vmem %s2, %s157
      $region16: #{discriminator_forward.7} parent=11 // pred_fallthru
        _
    $region12: #{discriminator_forward.7} parent=5 // pred_fallthru
      _
    %p159 = scmp.lt.s32.totalorder %s9, 3
    // Predicated region
    $region17: #{discriminator_forward.7} parent=5 // pred_check
      %p160 = pneg %p159
    $region18: #{discriminator_forward.7} parent=5 // pred_check_branch
      %162 = sbr.rel (%p160) target = $region20
    $region19: #{discriminator_forward.7} parent=5 // pred_region
      // Predicated region
      $region21: #{discriminator_forward.7} parent=19 // pred_check
        %p163 = pneg %p50
      $region22: #{discriminator_forward.7} parent=19 // pred_check_branch
        %165 = sbr.rel (%p163) target = $region24
      $region23: #{discriminator_forward.7} parent=19 // pred_region
        %s166 = smul.u32 3, %s18
        %p167 = scmp.lt.s32.totalorder %s16, 0
        %s168 = scalar_select %p167, %s16, 0
        %p169 = scmp.lt.s32.totalorder %s166, 8
        %s170 = scalar_select %p169, %s166, 8
        %s171 = smul.addr %s168, 9
        %s172 = sadd.s32 %s170, %s171
        %s173 = smul.addr %s172, 4
        %s174 = scalar_lea.vmem %s0, %s173
        %s175 = smul.u32 3, %s18
      $region24: #{discriminator_forward.7} parent=19 // pred_fallthru
        _
      // Predicated region
      $region25: #{discriminator_forward.7} parent=19 // pred_check
        %p176 = pneg %p78
      $region26: #{discriminator_forward.7} parent=19 // pred_check_branch
        %178 = sbr.rel (%p176) target = $region28
      $region27: #{discriminator_forward.7} parent=19 // pred_region
        %s179 = smul.u32 48, %s18
        %p180 = scmp.lt.s32.totalorder %s179, 143
        %s181 = scalar_select %p180, %s179, 143
        %p182 = scmp.lt.s32.totalorder %s17, 0
        %s183 = scalar_select %p182, %s17, 0
        %s184 = sadd.s32 %s183, %s181
        %s185 = smul.addr %s184, 4
        %s186 = scalar_lea.vmem %s1, %s185
        %s187 = smul.u32 48, %s18
      $region28: #{discriminator_forward.7} parent=19 // pred_fallthru
        _
    $region20: #{discriminator_forward.7} parent=5 // pred_fallthru
      _
    %p188 = scmp.le.s32.totalorder 1, %s9
    %p189 = scmp.lt.s32.totalorder %s9, 4
    %p190 = pnand %p188, %p189
    %p191 = pneg %p190
    // Predicated region
    $region29: #{discriminator_forward.7} parent=5 // pred_check
      _
    $region30: #{discriminator_forward.7} parent=5 // pred_check_branch
      %193 = sbr.rel (%p190) target = $region32
    $region31: #{discriminator_forward.7} parent=5 // pred_region
      %s194 = ssub.s32 %s9, 1
      %s195 = smul.u32 3, %s21
      %p196 = scmp.lt.s32.totalorder %s19, 0
      %s197 = scalar_select %p196, %s19, 0
      %p198 = scmp.lt.s32.totalorder %s195, 8
      %s199 = scalar_select %p198, %s195, 8
      %s200 = smul.addr %s197, 9
      %s201 = sadd.s32 %s199, %s200
      %s202 = smul.addr %s201, 4
      %s203 = scalar_lea.vmem %s0, %s202
      %p204 = pneg %p56
      %p205 = pneg %p53
      %s206 = smul.u32 48, %s21
      %p207 = scmp.lt.s32.totalorder %s206, 143
      %s208 = scalar_select %p207, %s206, 143
      %p209 = scmp.lt.s32.totalorder %s20, 0
      %s210 = scalar_select %p209, %s20, 0
      %s211 = sadd.s32 %s210, %s208
      %s212 = smul.addr %s211, 4
      %s213 = scalar_lea.vmem %s1, %s212
      %p214 = pneg %p84
      %p215 = pneg %p81
      %p216 = scmp.lt.s32.totalorder %s20, 0
      %s217 = scalar_select %p216, %s20, 0
      %s218 = scalar_lea.vmem %s2, %s217
      %p219 = pneg %p110
      %p220 = pneg %p107
      %p221 = pneg %p138
      %p222 = pneg %p135
      %p223 = scmp.lt.s32.totalorder %s19, 0
      %s224 = scalar_select %p223, %s19, 0
      %p225 = scmp.lt.s32.totalorder %s20, 0
      %s226 = scalar_select %p225, %s20, 0
      %s227 = sadd.s32 %s226, %s224
      %s228 = smul.addr %s227, 8
      %s229 = scalar_lea.vmem %s3, %s228
      %s230 = smul.u32 3, %s21
      %p231 = scmp.lt.s32.totalorder %s19, 0
      %s232 = scalar_select %p231, %s19, 0
      %p233 = scmp.lt.s32.totalorder %s230, 8
      %s234 = scalar_select %p233, %s230, 8
      %s235 = smul.addr %s232, 9
      %s236 = sadd.s32 %s234, %s235
      %s237 = smul.addr %s236, 4
      %s238 = scalar_lea.vmem %s0, %s237
      %s239 = smul.u32 3, %s21
      %s240 = smul.u32 48, %s21
      %p241 = scmp.lt.s32.totalorder %s240, 143
      %s242 = scalar_select %p241, %s240, 143
      %p243 = scmp.lt.s32.totalorder %s20, 0
      %s244 = scalar_select %p243, %s20, 0
      %s245 = sadd.s32 %s244, %s242
      %s246 = smul.addr %s245, 4
      %s247 = scalar_lea.vmem %s1, %s246
      %s248 = smul.u32 48, %s21
      %p249 = scmp.lt.s32.totalorder %s20, 0
      %s250 = scalar_select %p249, %s20, 0
      %s251 = scalar_lea.vmem %s2, %s250
      %p252 = scmp.lt.s32.totalorder %s19, 0
      %s253 = scalar_select %p252, %s19, 0
      %p254 = scmp.lt.s32.totalorder %s20, 0
      %s255 = scalar_select %p254, %s20, 0
      %s256 = sadd.s32 %s255, %s253
      %s257 = smul.addr %s256, 8
      %s258 = scalar_lea.vmem %s3, %s257
      %p260 = scmp.eq.s32.totalorder %s21, 0
      // Predicated region
      $region33: #{discriminator_forward.7} parent=31 // pred_check
        %p261 = pneg %p260
      $region34: #{discriminator_forward.7} parent=31 // pred_check_branch
        %263 = sbr.rel (%p261) target = $region36
      $region35: #{discriminator_forward.7} parent=31 // pred_region
        %264 = vst [vmem:[#allocation2] sm:$0xff] 0.0
      $region36: #{discriminator_forward.7} parent=31 // pred_fallthru
        _
      %v265 = vld [vmem:[%s247] sm:$0xf]
      %v266 = vld [vmem:[%s247 + $0x4] sm:$0xf]
      %v267 = vld [vmem:[%s247 + $0x8] sm:$0xf]
      %v268 = vld [vmem:[%s247 + $0xc] sm:$0xf]
      %v269 = vld [vmem:[%s247 + $0x10] sm:$0xf]
      %v270 = vld [vmem:[%s247 + $0x14] sm:$0xf]
      %v271 = vld [vmem:[%s247 + $0x18] sm:$0xf]
      %v272 = vld [vmem:[%s247 + $0x1c] sm:$0xf]
      %v273 = vld [vmem:[%s247 + $0x20] sm:$0xf]
      %v274 = vld [vmem:[%s247 + $0x24] sm:$0xf]
      %v275 = vld [vmem:[%s247 + $0x28] sm:$0xf]
      %v276 = vld [vmem:[%s247 + $0x2c] sm:$0xf]
      %v277 = vld [vmem:[%s247 + $0x30] sm:$0xf]
      %v278 = vld [vmem:[%s247 + $0x34] sm:$0xf]
      %v279 = vld [vmem:[%s247 + $0x38] sm:$0xf]
      %v280 = vld [vmem:[%s247 + $0x3c] sm:$0xf]
      %v281 = vld [vmem:[%s247 + $0x40] sm:$0xf]
      %v282 = vld [vmem:[%s247 + $0x44] sm:$0xf]
      %v283 = vld [vmem:[%s247 + $0x48] sm:$0xf]
      %v284 = vld [vmem:[%s247 + $0x4c] sm:$0xf]
      %v285 = vld [vmem:[%s247 + $0x50] sm:$0xf]
      %v286 = vld [vmem:[%s247 + $0x54] sm:$0xf]
      %v287 = vld [vmem:[%s247 + $0x58] sm:$0xf]
      %v288 = vld [vmem:[%s247 + $0x5c] sm:$0xf]
      %v289 = vld [vmem:[%s247 + $0x60] sm:$0xf]
      %v290 = vld [vmem:[%s247 + $0x64] sm:$0xf]
      %v291 = vld [vmem:[%s247 + $0x68] sm:$0xf]
      %v292 = vld [vmem:[%s247 + $0x6c] sm:$0xf]
      %v293 = vld [vmem:[%s247 + $0x70] sm:$0xf]
      %v294 = vld [vmem:[%s247 + $0x74] sm:$0xf]
      %v295 = vld [vmem:[%s247 + $0x78] sm:$0xf]
      %v296 = vld [vmem:[%s247 + $0x7c] sm:$0xf]
      %v297 = vld [vmem:[%s247 + $0x80] sm:$0xf]
      %v298 = vld [vmem:[%s247 + $0x84] sm:$0xf]
      %v299 = vld [vmem:[%s247 + $0x88] sm:$0xf]
      %v300 = vld [vmem:[%s247 + $0x8c] sm:$0xf]
      %v301 = vld [vmem:[%s247 + $0x90] sm:$0xf]
      %v302 = vld [vmem:[%s247 + $0x94] sm:$0xf]
      %v303 = vld [vmem:[%s247 + $0x98] sm:$0xf]
      %v304 = vld [vmem:[%s247 + $0x9c] sm:$0xf]
      %v305 = vld [vmem:[%s247 + $0xa0] sm:$0xf]
      %v306 = vld [vmem:[%s247 + $0xa4] sm:$0xf]
      %v307 = vld [vmem:[%s247 + $0xa8] sm:$0xf]
      %v308 = vld [vmem:[%s247 + $0xac] sm:$0xf]
      %v309 = vld [vmem:[%s247 + $0xb0] sm:$0xf]
      %v310 = vld [vmem:[%s247 + $0xb4] sm:$0xf]
      %v311 = vld [vmem:[%s247 + $0xb8] sm:$0xf]
      %v312 = vld [vmem:[%s247 + $0xbc] sm:$0xf]
      %v313 = vld [vmem:[#allocation2] sm:$0xff]
      %v314 = vld [vmem:[%s238] sm:$0xff]
      %v315 = vld [vmem:[%s238 + $0x8] sm:$0xf]
      %v318 = vunpack.c.l.b16 %v314
      %v319 = vunpack.c.h.b16 %v314
      %v320 = vunpack.c.l.b16 %v315
      %v321 = vpack.c.b16 %v318, %v318
      %v322 = vpack.c.b16 %v319, %v319
      %v323 = vpack.c.b16 %v320, %v320
      %v375 = vunpack.c.l.b16 %v265
      %v376 = vunpack.c.l.b16 %v266
      %v377 = vunpack.c.l.b16 %v267
      %v378 = vunpack.c.l.b16 %v268
      %v379 = vunpack.c.l.b16 %v269
      %v380 = vunpack.c.l.b16 %v270
      %v381 = vunpack.c.l.b16 %v271
      %v382 = vunpack.c.l.b16 %v272
      %v383 = vunpack.c.l.b16 %v273
      %v384 = vunpack.c.l.b16 %v274
      %v385 = vunpack.c.l.b16 %v275
      %v386 = vunpack.c.l.b16 %v276
      %v387 = vunpack.c.l.b16 %v277
      %v388 = vunpack.c.l.b16 %v278
      %v389 = vunpack.c.l.b16 %v279
      %v390 = vunpack.c.l.b16 %v280
      %v391 = vunpack.c.l.b16 %v281
      %v392 = vunpack.c.l.b16 %v282
      %v393 = vunpack.c.l.b16 %v283
      %v394 = vunpack.c.l.b16 %v284
      %v395 = vunpack.c.l.b16 %v285
      %v396 = vunpack.c.l.b16 %v286
      %v397 = vunpack.c.l.b16 %v287
      %v398 = vunpack.c.l.b16 %v288
      %v399 = vunpack.c.l.b16 %v289
      %v400 = vunpack.c.l.b16 %v290
      %v401 = vunpack.c.l.b16 %v291
      %v402 = vunpack.c.l.b16 %v292
      %v403 = vunpack.c.l.b16 %v293
      %v404 = vunpack.c.l.b16 %v294
      %v405 = vunpack.c.l.b16 %v295
      %v406 = vunpack.c.l.b16 %v296
      %v407 = vunpack.c.l.b16 %v297
      %v408 = vunpack.c.l.b16 %v298
      %v409 = vunpack.c.l.b16 %v299
      %v410 = vunpack.c.l.b16 %v300
      %v411 = vunpack.c.l.b16 %v301
      %v412 = vunpack.c.l.b16 %v302
      %v413 = vunpack.c.l.b16 %v303
      %v414 = vunpack.c.l.b16 %v304
      %v415 = vunpack.c.l.b16 %v305
      %v416 = vunpack.c.l.b16 %v306
      %v417 = vunpack.c.l.b16 %v307
      %v418 = vunpack.c.l.b16 %v308
      %v419 = vunpack.c.l.b16 %v309
      %v420 = vunpack.c.l.b16 %v310
      %v421 = vunpack.c.l.b16 %v311
      %v422 = vunpack.c.l.b16 %v312
      %v423 = vpack.c.b16 %v376, %v375
      %v424 = vpack.c.b16 %v378, %v377
      %v425 = vpack.c.b16 %v380, %v379
      %v426 = vpack.c.b16 %v382, %v381
      %v427 = vpack.c.b16 %v384, %v383
      %v428 = vpack.c.b16 %v386, %v385
      %v429 = vpack.c.b16 %v388, %v387
      %v430 = vpack.c.b16 %v390, %v389
      %v431 = vpack.c.b16 %v392, %v391
      %v432 = vpack.c.b16 %v394, %v393
      %v433 = vpack.c.b16 %v396, %v395
      %v434 = vpack.c.b16 %v398, %v397
      %v435 = vpack.c.b16 %v400, %v399
      %v436 = vpack.c.b16 %v402, %v401
      %v437 = vpack.c.b16 %v404, %v403
      %v438 = vpack.c.b16 %v406, %v405
      %v439 = vpack.c.b16 %v408, %v407
      %v440 = vpack.c.b16 %v410, %v409
      %v441 = vpack.c.b16 %v412, %v411
      %v442 = vpack.c.b16 %v414, %v413
      %v443 = vpack.c.b16 %v416, %v415
      %v444 = vpack.c.b16 %v418, %v417
      %v445 = vpack.c.b16 %v420, %v419
      %v446 = vpack.c.b16 %v422, %v421
      %471 = vmatprep.subr.bf16.mxu0 0
      %472 = vmatpush1.bf16.msra.mxu0 %v430
      %473 = vmatprep.subr.bf16.mxu0 0
      %474 = vmatpush1.bf16.msra.mxu0 %v429
      %475 = vmatprep.subr.bf16.mxu0 0
      %476 = vmatpush1.bf16.msra.mxu0 %v428
      %477 = vmatprep.subr.bf16.mxu0 0
      %478 = vmatpush1.bf16.msra.mxu0 %v427
      %479 = vmatprep.subr.bf16.mxu0 0
      %480 = vmatpush1.bf16.msra.mxu0 %v426
      %481 = vmatprep.subr.bf16.mxu0 0
      %482 = vmatpush1.bf16.msra.mxu0 %v425
      %483 = vmatprep.subr.bf16.mxu0 0
      %484 = vmatpush1.bf16.msra.mxu0 %v424
      %485 = vmatprep.subr.bf16.mxu0 0
      %486 = vmatpush1.bf16.msra.mxu0 %v423
      %487 = vmatprep.subr.bf16.mxu0 0
      %488 = vmatpush2.bf16.msra.mxu0 %v438
      %489 = vmatprep.subr.bf16.mxu0 0
      %490 = vmatpush2.bf16.msra.mxu0 %v437
      %491 = vmatprep.subr.bf16.mxu0 0
      %492 = vmatpush2.bf16.msra.mxu0 %v436
      %493 = vmatprep.subr.bf16.mxu0 0
      %494 = vmatpush2.bf16.msra.mxu0 %v435
      %495 = vmatprep.subr.bf16.mxu0 0
      %496 = vmatpush2.bf16.msra.mxu0 %v434
      %497 = vmatprep.subr.bf16.mxu0 0
      %498 = vmatpush2.bf16.msra.mxu0 %v433
      %499 = vmatprep.subr.bf16.mxu0 0
      %500 = vmatpush2.bf16.msra.mxu0 %v432
      %501 = vmatprep.subr.bf16.mxu0 0
      %502 = vmatpush2.bf16.msra.mxu0 %v431
      %503 = vmatprep.mubr.bf16.mxu0 %v322
      %504 = vmatmul.mubr.bf16.gmra.mxu0 %v321
      %v505 = vpop.f32.mrf.mxu0
      %v506 = vadd.f32 0.0, %v505
      %v507 = vpop.f32.mrf.mxu0
      %v508 = vpop.f32.mrf.mxu0
      %v509 = vpop.f32.mrf.mxu0
      %510 = vdwg.mxu0
      %511 = vmatprep.subr.bf16.mxu0 0
      %512 = vmatpush1.bf16.msra.mxu0 %v446
      %513 = vmatprep.subr.bf16.mxu0 0
      %514 = vmatpush1.bf16.msra.mxu0 %v445
      %515 = vmatprep.subr.bf16.mxu0 0
      %516 = vmatpush1.bf16.msra.mxu0 %v444
      %517 = vmatprep.subr.bf16.mxu0 0
      %518 = vmatpush1.bf16.msra.mxu0 %v443
      %519 = vmatprep.subr.bf16.mxu0 0
      %520 = vmatpush1.bf16.msra.mxu0 %v442
      %521 = vmatprep.subr.bf16.mxu0 0
      %522 = vmatpush1.bf16.msra.mxu0 %v441
      %523 = vmatprep.subr.bf16.mxu0 0
      %524 = vmatpush1.bf16.msra.mxu0 %v440
      %525 = vmatprep.subr.bf16.mxu0 0
      %526 = vmatpush1.bf16.msra.mxu0 %v439
      %527 = vmatprep.subr.bf16.mxu0 0
      %528 = vmatpush2.bf16.msra.mxu0 0
      %529 = vmatprep.subr.bf16.mxu0 0
      %530 = vmatpush2.bf16.msra.mxu0 0
      %531 = vmatprep.subr.bf16.mxu0 0
      %532 = vmatpush2.bf16.msra.mxu0 0
      %533 = vmatprep.subr.bf16.mxu0 0
      %534 = vmatpush2.bf16.msra.mxu0 0
      %535 = vmatprep.subr.bf16.mxu0 0
      %536 = vmatpush2.bf16.msra.mxu0 0
      %537 = vmatprep.subr.bf16.mxu0 0
      %538 = vmatpush2.bf16.msra.mxu0 0
      %539 = vmatprep.subr.bf16.mxu0 0
      %540 = vmatpush2.bf16.msra.mxu0 0
      %541 = vmatprep.subr.bf16.mxu0 0
      %542 = vmatpush2.bf16.msra.mxu0 0
      %543 = vmatprep.mubr.bf16.mxu0 0
      %544 = vmatmul.mubr.bf16.gmra.mxu0 %v323
      %v545 = vpop.f32.mrf.mxu0
      %v546 = vadd.f32 %v506, %v545
      %v547 = vpop.f32.mrf.mxu0
      %v548 = vpop.f32.mrf.mxu0
      %v549 = vpop.f32.mrf.mxu0
      %550 = vdwg.mxu0
      %v551 = vadd.f32 %v313, %v546
      %552 = vst [vmem:[#allocation2] sm:$0xff] %v551
      %p553 = scmp.eq.s32.totalorder %s21, 2
      // Predicated region
      $region37: #{discriminator_forward.7} parent=31 // pred_check
        %p554 = pneg %p553
      $region38: #{discriminator_forward.7} parent=31 // pred_check_branch
        %556 = sbr.rel (%p554) target = $region40
      $region39: #{discriminator_forward.7} parent=31 // pred_region
        %v557 = vld [vmem:[#allocation2] sm:$0xff]
        %v558 = vld [vmem:[%s251] sm:$0x1]
        %v560 = vlaneseq
        %v561 = vshrl.u32 %v560, 7
        %v562 = vsub.s32 0, %v561
        %v563 = vrot.slane %v558, %v562
        %v565 = vadd.f32 %v557, %v563
        %566 = vst [vmem:[%s258] sm:$0xff] %v565
      $region40: #{discriminator_forward.7} parent=31 // pred_fallthru
        _
      %p567 = scmp.lt.s32.totalorder %s19, 0
      %s568 = scalar_select %p567, %s19, 0
      %p569 = scmp.lt.s32.totalorder %s20, 0
      %s570 = scalar_select %p569, %s20, 0
      %s571 = sadd.s32 %s570, %s568
      %s572 = smul.addr %s571, 8
      %s573 = scalar_lea.vmem %s3, %s572
      // Predicated region
      $region41: #{discriminator_forward.7} parent=31 // pred_check
        %p574 = pneg %p135
      $region42: #{discriminator_forward.7} parent=31 // pred_check_branch
        %576 = sbr.rel (%p574) target = $region44
      $region43: #{discriminator_forward.7} parent=31 // pred_region
        _
      $region44: #{discriminator_forward.7} parent=31 // pred_fallthru
        _
      // Predicated region
      $region45: #{discriminator_forward.7} parent=31 // pred_check
        %p577 = pneg %p135
      $region46: #{discriminator_forward.7} parent=31 // pred_check_branch
        %579 = sbr.rel (%p577) target = $region48
      $region47: #{discriminator_forward.7} parent=31 // pred_region
        %p580 = scmp.lt.s32.totalorder %s19, 0
        %s581 = scalar_select %p580, %s19, 0
        %p582 = scmp.lt.s32.totalorder %s20, 0
        %s583 = scalar_select %p582, %s20, 0
        %s584 = sadd.s32 %s583, %s581
        %s585 = smul.addr %s584, 8
        %s586 = scalar_lea.vmem %s3, %s585
      $region48: #{discriminator_forward.7} parent=31 // pred_fallthru
        _
    $region32: #{discriminator_forward.7} parent=5 // pred_fallthru
      _
    %p587 = scmp.le.s32.totalorder 2, %s9
    // Predicated region
    $region49: #{discriminator_forward.7} parent=5 // pred_check
      %p588 = pneg %p587
    $region50: #{discriminator_forward.7} parent=5 // pred_check_branch
      %590 = sbr.rel (%p588) target = $region52
    $region51: #{discriminator_forward.7} parent=5 // pred_region
      %s591 = ssub.s32 %s9, 2
    $region52: #{discriminator_forward.7} parent=5 // pred_fallthru
      _
  $region6: #{discriminator_forward.7} parent=0 // loop_footer
    %s13 = sadd.s32 1, %s9
  $region7: #{discriminator_forward.7} parent=0 // loop_footer_branch
    %8 = sbr.rel target = $region3
  $region8: #{discriminator_forward.7} parent=0 // loop_exit
    _

</llo_original>
